<compile_context>
chip_gen: v7x
topology: tpu7x:2x2x1
jax: 0.10.0
libtpu: 0.0.40
codegen_flags: <defaults>
</compile_context>

<pallas_src>
import jax
import jax.numpy as jnp
from jax.experimental import pallas as pl
from jax.experimental.pallas import tpu as pltpu


# --------------------------------------------------------------------- fused kernel
def rnn_decoder_kernel(dec_ref, enc_ref, wih_ref, whh_ref, blstm_ref,
                       wfc_ref, bfc_ref, wfe_ref, wfh_ref, bfin_ref,
                       out_ref, h_sc, c_sc, hs_sc):
    T, F, L = dec_ref.shape
    E = whh_ref.shape[0]

    # h/c carries live in VMEM scratch; the recurrence is a sequential
    # lax.fori_loop inside the kernel (no grid axis -> nothing can be
    # accidentally parallelized over time).
    h_sc[...] = jnp.zeros_like(h_sc)
    c_sc[...] = jnp.zeros_like(c_sc)

    def step(t, carry):
        x = dec_ref[t]                       # (F, L)  current time-step input
        h_prev = h_sc[...]                   # (F, E)
        # Fused gate pre-activations: one lane-dense (F, 4E) tile instead of
        # 8 tiny per-gate matmuls.  Gate order (i, f, g, o) as in PyTorch.
        z = (jnp.dot(x, wih_ref[...], preferred_element_type=jnp.float32)
             + jnp.dot(h_prev, whh_ref[...], preferred_element_type=jnp.float32)
             + blstm_ref[...])               # (1,4E) bias broadcasts over (F,4E)
        i = jax.nn.sigmoid(z[:, 0 * E:1 * E])
        f = jax.nn.sigmoid(z[:, 1 * E:2 * E])
        g = jnp.tanh(z[:, 2 * E:3 * E])
        o = jax.nn.sigmoid(z[:, 3 * E:4 * E])
        c = f * c_sc[...] + i * g
        h = o * jnp.tanh(c)
        c_sc[...] = c
        h_sc[...] = h
        hs_sc[t] = h                         # keep all hidden states in VMEM
        return carry

    jax.lax.fori_loop(0, T, step, 0, unroll=True)

    # hidden = rnn_fc(hidden.view(T, -1))
    #   hflat @ w_fc2d  ==  sum_f  hs[:, f, :] @ w_fc[f]      (no in-kernel reshape)
    fc_dim = bfc_ref.shape[-1]
    hid = bfc_ref[...]                                        # (1, fc_dim), broadcasts
    for f_idx in range(F):                                    # F is small & static
        hid = hid + jnp.dot(hs_sc[:, f_idx, :], wfc_ref[f_idx],
                            preferred_element_type=jnp.float32)

    # final_layer(cat([enc_out, hidden], dim=1))
    #   == enc_out @ W_final[:, :1000].T + hidden @ W_final[:, 1000:].T + b_final
    out = (jnp.dot(enc_ref[...], wfe_ref[...], preferred_element_type=jnp.float32)
           + jnp.dot(hid, wfh_ref[...], preferred_element_type=jnp.float32)
           + bfin_ref[...])
    # nn.Dropout is the identity in eval mode.
    # TODO(synk): training-mode dropout (Bernoulli mask / (1-rate) scaling) omitted.
    out_ref[...] = out.astype(out_ref.dtype)


# --------------------------------------------------------------------------- driver
def rnn_decoder_forward(enc_out, dec_inp, params):
    T, F, L = dec_inp.shape
    E = params["w_hh"].shape[0]
    class_n = params["b_final"].shape[-1]

    # Everything fits comfortably in VMEM (< 1 MiB f32) on v5e/v6e/v7x, so a
    # single grid-less call with whole-array (VMEM-resident) inputs is optimal:
    # one DMA per operand, one bulk output store, no pipelining machinery.
    return pl.pallas_call(
        rnn_decoder_kernel,
        out_shape=jax.ShapeDtypeStruct((T, class_n), jnp.float32),
        scratch_shapes=[
            pltpu.VMEM((F, E), jnp.float32),     # h carry
            pltpu.VMEM((F, E), jnp.float32),     # c carry
            pltpu.VMEM((T, F, E), jnp.float32),  # all per-step hidden states
        ],
    )(dec_inp, enc_out,
      params["w_ih"], params["w_hh"], params["b_lstm"],
      params["w_fc"], params["b_fc"],
      params["w_final_enc"], params["w_final_hid"], params["b_final"])


def init_params(key, max_len, embedding_dim, num_features, class_n, fc_dim=1000):
    ks = jax.random.split(key, 8)
    s = 0.1
    L, E, F = max_len, embedding_dim, num_features
    return {
        # LSTM gate weights concatenated along the output dim, gate order (i,f,g,o).
        "w_ih": jax.random.normal(ks[0], (L, 4 * E), jnp.float32) * s,
        "w_hh": jax.random.normal(ks[1], (E, 4 * E), jnp.float32) * s,
        "b_lstm": jax.random.normal(ks[2], (1, 4 * E), jnp.float32) * s,   # b_ih + b_hh
        # rnn_fc weight stored (F, E, fc_dim): w_fc[f, e, :] multiplies h[:, f, e].
        "w_fc": jax.random.normal(ks[3], (F, E, fc_dim), jnp.float32) * s,
        "b_fc": jax.random.normal(ks[4], (1, fc_dim), jnp.float32) * s,
        "w_final_enc": jax.random.normal(ks[5], (fc_dim, class_n), jnp.float32) * s,
        "w_final_hid": jax.random.normal(ks[6], (fc_dim, class_n), jnp.float32) * s,
        "b_final": jax.random.normal(ks[7], (1, class_n), jnp.float32) * s,
    }


def reference_forward(enc_out, dec_inp, p):
    """Pure-JAX reference reproducing the PyTorch forward (eval mode)."""
    T, F, L = dec_inp.shape
    E = p["w_hh"].shape[0]

    def step(carry, x_t):
        h, c = carry
        z = x_t @ p["w_ih"] + h @ p["w_hh"] + p["b_lstm"]
        i = jax.nn.sigmoid(z[:, 0 * E:1 * E])
        f = jax.nn.sigmoid(z[:, 1 * E:2 * E])
        g = jnp.tanh(z[:, 2 * E:3 * E])
        o = jax.nn.sigmoid(z[:, 3 * E:4 * E])
        c = f * c + i * g
        h = o * jnp.tanh(c)
        return (h, c), h

    init = (jnp.zeros((F, E), jnp.float32), jnp.zeros((F, E), jnp.float32))
    _, hs = jax.lax.scan(step, init, dec_inp)          # (T, F, E)
    hflat = hs.reshape(T, F * E)                       # torch: hidden.view(T, -1)
    hid = hflat @ p["w_fc"].reshape(F * E, -1) + p["b_fc"]
    return enc_out @ p["w_final_enc"] + hid @ p["w_final_hid"] + p["b_final"]


if __name__ == "__main__":
    # Small, forward-consistent shapes.
    T = 2            # outer batch  (== LSTM seq_len, since batch_first=False)
    F = 4            # num_features (== LSTM batch)
    L = 16           # max_len      (== LSTM input_size)
    E = 32           # embedding_dim (== LSTM hidden_size); 4E = 128 lanes
    CLASS_N = 8
    FC_DIM = 1000    # hardcoded in the module

    key = jax.random.PRNGKey(0)
    k_enc, k_dec, k_par = jax.random.split(key, 3)

    enc_out = jax.random.normal(k_enc, (T, FC_DIM), jnp.float32)
    dec_inp = jax.random.normal(k_dec, (T, F, L), jnp.float32)
    params = init_params(k_par, L, E, F, CLASS_N, FC_DIM)

    out = rnn_decoder_forward(enc_out, dec_inp, params)
    out = jax.block_until_ready(out)

    ref = reference_forward(enc_out, dec_inp, params)
    assert out.shape == (T, CLASS_N), out.shape
    assert jnp.allclose(out, ref, atol=1e-4, rtol=1e-4), float(jnp.max(jnp.abs(out - ref)))

    print("KERNEL_OK")
</pallas_src>

<mosaic_0001>
module attributes {stable_mosaic.version = 11 : i64} {
  func.func @rnn_decoder_kernel(%arg0: memref<2x4x16xf32, #tpu.memory_space<vmem>>, %arg1: memref<2x1000xf32, #tpu.memory_space<vmem>>, %arg2: memref<16x128xf32, #tpu.memory_space<vmem>>, %arg3: memref<32x128xf32, #tpu.memory_space<vmem>>, %arg4: memref<1x128xf32, #tpu.memory_space<vmem>>, %arg5: memref<4x32x1000xf32, #tpu.memory_space<vmem>>, %arg6: memref<1x1000xf32, #tpu.memory_space<vmem>>, %arg7: memref<1000x8xf32, #tpu.memory_space<vmem>>, %arg8: memref<1000x8xf32, #tpu.memory_space<vmem>>, %arg9: memref<1x8xf32, #tpu.memory_space<vmem>>, %arg10: memref<2x8xf32, #tpu.memory_space<vmem>>, %arg11: memref<4x32xf32, #tpu.memory_space<vmem>>, %arg12: memref<4x32xf32, #tpu.memory_space<vmem>>, %arg13: memref<2x4x32xf32, #tpu.memory_space<vmem>>) attributes {dimension_semantics = [], scalar_prefetch = 0 : i64, scratch_operands = 3 : i64, tpu.core_type = #tpu.core_type<tc>} {
    %cst = arith.constant 0.000000e+00 : f32
    %0 = vector.broadcast %cst : f32 to vector<4x32xf32>
    %c0 = arith.constant 0 : index
    %c0_0 = arith.constant 0 : index
    %1 = vector.load %arg11[%c0, %c0_0] : memref<4x32xf32, #tpu.memory_space<vmem>>, vector<4x32xf32>
    tpu.vector_store %arg11[%c0, %c0_0], %0 {strides = array<i32>} : memref<4x32xf32, #tpu.memory_space<vmem>>, vector<4x32xf32>,
    %cst_1 = arith.constant 0.000000e+00 : f32
    %2 = vector.broadcast %cst_1 : f32 to vector<4x32xf32>
    %c0_2 = arith.constant 0 : index
    %c0_3 = arith.constant 0 : index
    %3 = vector.load %arg12[%c0_2, %c0_3] : memref<4x32xf32, #tpu.memory_space<vmem>>, vector<4x32xf32>
    tpu.vector_store %arg12[%c0_2, %c0_3], %2 {strides = array<i32>} : memref<4x32xf32, #tpu.memory_space<vmem>>, vector<4x32xf32>,
    %c0_i32 = arith.constant 0 : i32
    %4 = arith.index_cast %c0_i32 : i32 to index
    %c0_4 = arith.constant 0 : index
    %c0_5 = arith.constant 0 : index
    %5 = vector.load %arg0[%4, %c0_4, %c0_5] : memref<2x4x16xf32, #tpu.memory_space<vmem>>, vector<1x4x16xf32>
    %6 = vector.shape_cast %5 : vector<1x4x16xf32> to vector<4x16xf32>
    %c0_6 = arith.constant 0 : index
    %c0_7 = arith.constant 0 : index
    %7 = vector.load %arg11[%c0_6, %c0_7] : memref<4x32xf32, #tpu.memory_space<vmem>>, vector<4x32xf32>
    %c0_8 = arith.constant 0 : index
    %c0_9 = arith.constant 0 : index
    %8 = vector.load %arg2[%c0_8, %c0_9] : memref<16x128xf32, #tpu.memory_space<vmem>>, vector<16x128xf32>
    %cst_10 = arith.constant dense<0.000000e+00> : vector<4x128xf32>
    %9 = tpu.matmul %6, %8, %cst_10 {dimension_numbers = #tpu.dot_dimension_numbers<[1], [0], [0], [1], [0, 0, 1, 1], [], []>} : vector<4x16xf32>, vector<16x128xf32>, vector<4x128xf32> -> vector<4x128xf32>
    %c0_11 = arith.constant 0 : index
    %c0_12 = arith.constant 0 : index
    %10 = vector.load %arg3[%c0_11, %c0_12] : memref<32x128xf32, #tpu.memory_space<vmem>>, vector<32x128xf32>
    %cst_13 = arith.constant dense<0.000000e+00> : vector<4x128xf32>
    %11 = tpu.matmul %7, %10, %cst_13 {dimension_numbers = #tpu.dot_dimension_numbers<[1], [0], [0], [1], [0, 0, 1, 1], [], []>} : vector<4x32xf32>, vector<32x128xf32>, vector<4x128xf32> -> vector<4x128xf32>
    %12 = arith.addf %9, %11 : vector<4x128xf32>
    %c0_14 = arith.constant 0 : index
    %c0_15 = arith.constant 0 : index
    %13 = vector.load %arg4[%c0_14, %c0_15] : memref<1x128xf32, #tpu.memory_space<vmem>>, vector<1x128xf32>
    %14 = vector.broadcast %13 : vector<1x128xf32> to vector<4x128xf32>
    %15 = arith.addf %12, %14 : vector<4x128xf32>
    %16 = vector.extract_strided_slice %15 {offsets = [0, 0], sizes = [4, 32], strides = [1, 1]} : vector<4x128xf32> to vector<4x32xf32>
    %17 = arith.negf %16 : vector<4x32xf32>
    %18 = math.exp %17 : vector<4x32xf32>
    %cst_16 = arith.constant 1.000000e+00 : f32
    %19 = vector.broadcast %cst_16 : f32 to vector<4x32xf32>
    %20 = arith.addf %19, %18 : vector<4x32xf32>
    %21 = arith.divf %19, %20 : vector<4x32xf32>
    %22 = vector.extract_strided_slice %15 {offsets = [0, 32], sizes = [4, 32], strides = [1, 1]} : vector<4x128xf32> to vector<4x32xf32>
    %23 = arith.negf %22 : vector<4x32xf32>
    %24 = math.exp %23 : vector<4x32xf32>
    %cst_17 = arith.constant 1.000000e+00 : f32
    %25 = vector.broadcast %cst_17 : f32 to vector<4x32xf32>
    %26 = arith.addf %25, %24 : vector<4x32xf32>
    %27 = arith.divf %25, %26 : vector<4x32xf32>
    %28 = vector.extract_strided_slice %15 {offsets = [0, 64], sizes = [4, 32], strides = [1, 1]} : vector<4x128xf32> to vector<4x32xf32>
    %29 = math.tanh %28 : vector<4x32xf32>
    %30 = vector.extract_strided_slice %15 {offsets = [0, 96], sizes = [4, 32], strides = [1, 1]} : vector<4x128xf32> to vector<4x32xf32>
    %31 = arith.negf %30 : vector<4x32xf32>
    %32 = math.exp %31 : vector<4x32xf32>
    %cst_18 = arith.constant 1.000000e+00 : f32
    %33 = vector.broadcast %cst_18 : f32 to vector<4x32xf32>
    %34 = arith.addf %33, %32 : vector<4x32xf32>
    %35 = arith.divf %33, %34 : vector<4x32xf32>
    %c0_19 = arith.constant 0 : index
    %c0_20 = arith.constant 0 : index
    %36 = vector.load %arg12[%c0_19, %c0_20] : memref<4x32xf32, #tpu.memory_space<vmem>>, vector<4x32xf32>
    %37 = arith.mulf %27, %36 : vector<4x32xf32>
    %38 = arith.mulf %21, %29 : vector<4x32xf32>
    %39 = arith.addf %37, %38 : vector<4x32xf32>
    %40 = math.tanh %39 : vector<4x32xf32>
    %41 = arith.mulf %35, %40 : vector<4x32xf32>
    %c0_21 = arith.constant 0 : index
    %c0_22 = arith.constant 0 : index
    %42 = vector.load %arg12[%c0_21, %c0_22] : memref<4x32xf32, #tpu.memory_space<vmem>>, vector<4x32xf32>
    tpu.vector_store %arg12[%c0_21, %c0_22], %39 {strides = array<i32>} : memref<4x32xf32, #tpu.memory_space<vmem>>, vector<4x32xf32>,
    %c0_23 = arith.constant 0 : index
    %c0_24 = arith.constant 0 : index
    %43 = vector.load %arg11[%c0_23, %c0_24] : memref<4x32xf32, #tpu.memory_space<vmem>>, vector<4x32xf32>
    tpu.vector_store %arg11[%c0_23, %c0_24], %41 {strides = array<i32>} : memref<4x32xf32, #tpu.memory_space<vmem>>, vector<4x32xf32>,
    %44 = arith.index_cast %c0_i32 : i32 to index
    %c0_25 = arith.constant 0 : index
    %c0_26 = arith.constant 0 : index
    %45 = vector.load %arg13[%44, %c0_25, %c0_26] : memref<2x4x32xf32, #tpu.memory_space<vmem>>, vector<1x4x32xf32>
    %46 = vector.shape_cast %45 : vector<1x4x32xf32> to vector<4x32xf32>
    %47 = vector.shape_cast %41 : vector<4x32xf32> to vector<1x4x32xf32>
    tpu.vector_store %arg13[%44, %c0_25, %c0_26], %47 {strides = array<i32>} : memref<2x4x32xf32, #tpu.memory_space<vmem>>, vector<1x4x32xf32>,
    %c1_i32 = arith.constant 1 : i32
    %48 = arith.index_cast %c1_i32 : i32 to index
    %c0_27 = arith.constant 0 : index
    %c0_28 = arith.constant 0 : index
    %49 = vector.load %arg0[%48, %c0_27, %c0_28] : memref<2x4x16xf32, #tpu.memory_space<vmem>>, vector<1x4x16xf32>
    %50 = vector.shape_cast %49 : vector<1x4x16xf32> to vector<4x16xf32>
    %c0_29 = arith.constant 0 : index
    %c0_30 = arith.constant 0 : index
    %51 = vector.load %arg11[%c0_29, %c0_30] : memref<4x32xf32, #tpu.memory_space<vmem>>, vector<4x32xf32>
    %c0_31 = arith.constant 0 : index
    %c0_32 = arith.constant 0 : index
    %52 = vector.load %arg2[%c0_31, %c0_32] : memref<16x128xf32, #tpu.memory_space<vmem>>, vector<16x128xf32>
    %cst_33 = arith.constant dense<0.000000e+00> : vector<4x128xf32>
    %53 = tpu.matmul %50, %52, %cst_33 {dimension_numbers = #tpu.dot_dimension_numbers<[1], [0], [0], [1], [0, 0, 1, 1], [], []>} : vector<4x16xf32>, vector<16x128xf32>, vector<4x128xf32> -> vector<4x128xf32>
    %c0_34 = arith.constant 0 : index
    %c0_35 = arith.constant 0 : index
    %54 = vector.load %arg3[%c0_34, %c0_35] : memref<32x128xf32, #tpu.memory_space<vmem>>, vector<32x128xf32>
    %cst_36 = arith.constant dense<0.000000e+00> : vector<4x128xf32>
    %55 = tpu.matmul %51, %54, %cst_36 {dimension_numbers = #tpu.dot_dimension_numbers<[1], [0], [0], [1], [0, 0, 1, 1], [], []>} : vector<4x32xf32>, vector<32x128xf32>, vector<4x128xf32> -> vector<4x128xf32>
    %56 = arith.addf %53, %55 : vector<4x128xf32>
    %c0_37 = arith.constant 0 : index
    %c0_38 = arith.constant 0 : index
    %57 = vector.load %arg4[%c0_37, %c0_38] : memref<1x128xf32, #tpu.memory_space<vmem>>, vector<1x128xf32>
    %58 = vector.broadcast %57 : vector<1x128xf32> to vector<4x128xf32>
    %59 = arith.addf %56, %58 : vector<4x128xf32>
    %60 = vector.extract_strided_slice %59 {offsets = [0, 0], sizes = [4, 32], strides = [1, 1]} : vector<4x128xf32> to vector<4x32xf32>
    %61 = arith.negf %60 : vector<4x32xf32>
    %62 = math.exp %61 : vector<4x32xf32>
    %cst_39 = arith.constant 1.000000e+00 : f32
    %63 = vector.broadcast %cst_39 : f32 to vector<4x32xf32>
    %64 = arith.addf %63, %62 : vector<4x32xf32>
    %65 = arith.divf %63, %64 : vector<4x32xf32>
    %66 = vector.extract_strided_slice %59 {offsets = [0, 32], sizes = [4, 32], strides = [1, 1]} : vector<4x128xf32> to vector<4x32xf32>
    %67 = arith.negf %66 : vector<4x32xf32>
    %68 = math.exp %67 : vector<4x32xf32>
    %cst_40 = arith.constant 1.000000e+00 : f32
    %69 = vector.broadcast %cst_40 : f32 to vector<4x32xf32>
    %70 = arith.addf %69, %68 : vector<4x32xf32>
    %71 = arith.divf %69, %70 : vector<4x32xf32>
    %72 = vector.extract_strided_slice %59 {offsets = [0, 64], sizes = [4, 32], strides = [1, 1]} : vector<4x128xf32> to vector<4x32xf32>
    %73 = math.tanh %72 : vector<4x32xf32>
    %74 = vector.extract_strided_slice %59 {offsets = [0, 96], sizes = [4, 32], strides = [1, 1]} : vector<4x128xf32> to vector<4x32xf32>
    %75 = arith.negf %74 : vector<4x32xf32>
    %76 = math.exp %75 : vector<4x32xf32>
    %cst_41 = arith.constant 1.000000e+00 : f32
    %77 = vector.broadcast %cst_41 : f32 to vector<4x32xf32>
    %78 = arith.addf %77, %76 : vector<4x32xf32>
    %79 = arith.divf %77, %78 : vector<4x32xf32>
    %c0_42 = arith.constant 0 : index
    %c0_43 = arith.constant 0 : index
    %80 = vector.load %arg12[%c0_42, %c0_43] : memref<4x32xf32, #tpu.memory_space<vmem>>, vector<4x32xf32>
    %81 = arith.mulf %71, %80 : vector<4x32xf32>
    %82 = arith.mulf %65, %73 : vector<4x32xf32>
    %83 = arith.addf %81, %82 : vector<4x32xf32>
    %84 = math.tanh %83 : vector<4x32xf32>
    %85 = arith.mulf %79, %84 : vector<4x32xf32>
    %c0_44 = arith.constant 0 : index
    %c0_45 = arith.constant 0 : index
    %86 = vector.load %arg12[%c0_44, %c0_45] : memref<4x32xf32, #tpu.memory_space<vmem>>, vector<4x32xf32>
    tpu.vector_store %arg12[%c0_44, %c0_45], %83 {strides = array<i32>} : memref<4x32xf32, #tpu.memory_space<vmem>>, vector<4x32xf32>,
    %c0_46 = arith.constant 0 : index
    %c0_47 = arith.constant 0 : index
    %87 = vector.load %arg11[%c0_46, %c0_47] : memref<4x32xf32, #tpu.memory_space<vmem>>, vector<4x32xf32>
    tpu.vector_store %arg11[%c0_46, %c0_47], %85 {strides = array<i32>} : memref<4x32xf32, #tpu.memory_space<vmem>>, vector<4x32xf32>,
    %88 = arith.index_cast %c1_i32 : i32 to index
    %c0_48 = arith.constant 0 : index
    %c0_49 = arith.constant 0 : index
    %89 = vector.load %arg13[%88, %c0_48, %c0_49] : memref<2x4x32xf32, #tpu.memory_space<vmem>>, vector<1x4x32xf32>
    %90 = vector.shape_cast %89 : vector<1x4x32xf32> to vector<4x32xf32>
    %91 = vector.shape_cast %85 : vector<4x32xf32> to vector<1x4x32xf32>
    tpu.vector_store %arg13[%88, %c0_48, %c0_49], %91 {strides = array<i32>} : memref<2x4x32xf32, #tpu.memory_space<vmem>>, vector<1x4x32xf32>,
    %c2_i32 = arith.constant 2 : i32
    %c0_50 = arith.constant 0 : index
    %c0_51 = arith.constant 0 : index
    %92 = vector.load %arg6[%c0_50, %c0_51] : memref<1x1000xf32, #tpu.memory_space<vmem>>, vector<1x1000xf32>
    %c0_52 = arith.constant 0 : index
    %c0_53 = arith.constant 0 : index
    %c0_54 = arith.constant 0 : index
    %93 = vector.load %arg13[%c0_52, %c0_53, %c0_54] : memref<2x4x32xf32, #tpu.memory_space<vmem>>, vector<2x1x32xf32>
    %94 = vector.shape_cast %93 : vector<2x1x32xf32> to vector<2x32xf32>
    %c0_55 = arith.constant 0 : index
    %c0_56 = arith.constant 0 : index
    %c0_57 = arith.constant 0 : index
    %95 = vector.load %arg5[%c0_55, %c0_56, %c0_57] : memref<4x32x1000xf32, #tpu.memory_space<vmem>>, vector<1x32x1000xf32>
    %96 = vector.shape_cast %95 : vector<1x32x1000xf32> to vector<32x1000xf32>
    %cst_58 = arith.constant dense<0.000000e+00> : vector<2x1000xf32>
    %97 = tpu.matmul %94, %96, %cst_58 {dimension_numbers = #tpu.dot_dimension_numbers<[1], [0], [0], [1], [0, 0, 1, 1], [], []>} : vector<2x32xf32>, vector<32x1000xf32>, vector<2x1000xf32> -> vector<2x1000xf32>
    %98 = vector.broadcast %92 : vector<1x1000xf32> to vector<2x1000xf32>
    %99 = arith.addf %98, %97 : vector<2x1000xf32>
    %c0_59 = arith.constant 0 : index
    %c1 = arith.constant 1 : index
    %c0_60 = arith.constant 0 : index
    %100 = vector.load %arg13[%c0_59, %c1, %c0_60] : memref<2x4x32xf32, #tpu.memory_space<vmem>>, vector<2x1x32xf32>
    %101 = vector.shape_cast %100 : vector<2x1x32xf32> to vector<2x32xf32>
    %c1_61 = arith.constant 1 : index
    %c0_62 = arith.constant 0 : index
    %c0_63 = arith.constant 0 : index
    %102 = vector.load %arg5[%c1_61, %c0_62, %c0_63] : memref<4x32x1000xf32, #tpu.memory_space<vmem>>, vector<1x32x1000xf32>
    %103 = vector.shape_cast %102 : vector<1x32x1000xf32> to vector<32x1000xf32>
    %cst_64 = arith.constant dense<0.000000e+00> : vector<2x1000xf32>
    %104 = tpu.matmul %101, %103, %cst_64 {dimension_numbers = #tpu.dot_dimension_numbers<[1], [0], [0], [1], [0, 0, 1, 1], [], []>} : vector<2x32xf32>, vector<32x1000xf32>, vector<2x1000xf32> -> vector<2x1000xf32>
    %105 = arith.addf %99, %104 : vector<2x1000xf32>
    %c0_65 = arith.constant 0 : index
    %c2 = arith.constant 2 : index
    %c0_66 = arith.constant 0 : index
    %106 = vector.load %arg13[%c0_65, %c2, %c0_66] : memref<2x4x32xf32, #tpu.memory_space<vmem>>, vector<2x1x32xf32>
    %107 = vector.shape_cast %106 : vector<2x1x32xf32> to vector<2x32xf32>
    %c2_67 = arith.constant 2 : index
    %c0_68 = arith.constant 0 : index
    %c0_69 = arith.constant 0 : index
    %108 = vector.load %arg5[%c2_67, %c0_68, %c0_69] : memref<4x32x1000xf32, #tpu.memory_space<vmem>>, vector<1x32x1000xf32>
    %109 = vector.shape_cast %108 : vector<1x32x1000xf32> to vector<32x1000xf32>
    %cst_70 = arith.constant dense<0.000000e+00> : vector<2x1000xf32>
    %110 = tpu.matmul %107, %109, %cst_70 {dimension_numbers = #tpu.dot_dimension_numbers<[1], [0], [0], [1], [0, 0, 1, 1], [], []>} : vector<2x32xf32>, vector<32x1000xf32>, vector<2x1000xf32> -> vector<2x1000xf32>
    %111 = arith.addf %105, %110 : vector<2x1000xf32>
    %c0_71 = arith.constant 0 : index
    %c3 = arith.constant 3 : index
    %c0_72 = arith.constant 0 : index
    %112 = vector.load %arg13[%c0_71, %c3, %c0_72] : memref<2x4x32xf32, #tpu.memory_space<vmem>>, vector<2x1x32xf32>
    %113 = vector.shape_cast %112 : vector<2x1x32xf32> to vector<2x32xf32>
    %c3_73 = arith.constant 3 : index
    %c0_74 = arith.constant 0 : index
    %c0_75 = arith.constant 0 : index
    %114 = vector.load %arg5[%c3_73, %c0_74, %c0_75] : memref<4x32x1000xf32, #tpu.memory_space<vmem>>, vector<1x32x1000xf32>
    %115 = vector.shape_cast %114 : vector<1x32x1000xf32> to vector<32x1000xf32>
    %cst_76 = arith.constant dense<0.000000e+00> : vector<2x1000xf32>
    %116 = tpu.matmul %113, %115, %cst_76 {dimension_numbers = #tpu.dot_dimension_numbers<[1], [0], [0], [1], [0, 0, 1, 1], [], []>} : vector<2x32xf32>, vector<32x1000xf32>, vector<2x1000xf32> -> vector<2x1000xf32>
    %117 = arith.addf %111, %116 : vector<2x1000xf32>
    %c0_77 = arith.constant 0 : index
    %c0_78 = arith.constant 0 : index
    %118 = vector.load %arg1[%c0_77, %c0_78] : memref<2x1000xf32, #tpu.memory_space<vmem>>, vector<2x1000xf32>
    %c0_79 = arith.constant 0 : index
    %c0_80 = arith.constant 0 : index
    %119 = vector.load %arg7[%c0_79, %c0_80] : memref<1000x8xf32, #tpu.memory_space<vmem>>, vector<1000x8xf32>
    %cst_81 = arith.constant dense<0.000000e+00> : vector<2x8xf32>
    %120 = tpu.matmul %118, %119, %cst_81 {dimension_numbers = #tpu.dot_dimension_numbers<[1], [0], [0], [1], [0, 0, 1, 1], [], []>} : vector<2x1000xf32>, vector<1000x8xf32>, vector<2x8xf32> -> vector<2x8xf32>
    %c0_82 = arith.constant 0 : index
    %c0_83 = arith.constant 0 : index
    %121 = vector.load %arg8[%c0_82, %c0_83] : memref<1000x8xf32, #tpu.memory_space<vmem>>, vector<1000x8xf32>
    %cst_84 = arith.constant dense<0.000000e+00> : vector<2x8xf32>
    %122 = tpu.matmul %117, %121, %cst_84 {dimension_numbers = #tpu.dot_dimension_numbers<[1], [0], [0], [1], [0, 0, 1, 1], [], []>} : vector<2x1000xf32>, vector<1000x8xf32>, vector<2x8xf32> -> vector<2x8xf32>
    %123 = arith.addf %120, %122 : vector<2x8xf32>
    %c0_85 = arith.constant 0 : index
    %c0_86 = arith.constant 0 : index
    %124 = vector.load %arg9[%c0_85, %c0_86] : memref<1x8xf32, #tpu.memory_space<vmem>>, vector<1x8xf32>
    %125 = vector.broadcast %124 : vector<1x8xf32> to vector<2x8xf32>
    %126 = arith.addf %123, %125 : vector<2x8xf32>
    %c0_87 = arith.constant 0 : index
    %c0_88 = arith.constant 0 : index
    %127 = vector.load %arg10[%c0_87, %c0_88] : memref<2x8xf32, #tpu.memory_space<vmem>>, vector<2x8xf32>
    tpu.vector_store %arg10[%c0_87, %c0_88], %126 {strides = array<i32>} : memref<2x8xf32, #tpu.memory_space<vmem>>, vector<2x8xf32>,
    return
  }
}

</mosaic_0001>

<llo_original>
// kernel: tpu_custom_call.1
$region0: #{tpu_custom_call.1}
  #allocation0 [shape = 'u32[]', space=smem, size = 0x4, offset = 0x4, fixed_abs, tag = 'smem constant byte address 0x4 - core index']
  #allocation1 [shape = 'u32[144,128]{1,0:T(1,128)}', space=vmem, size = 0x12000, scoped, tag = 'internal scratch']
  #allocation2 [shape = 'f32[4,32]{1,0:T(4,128)}', space=vmem, size = 0x800, scoped, tag = 'scratch operand']
  #allocation3 [shape = 'f32[4,32]{1,0:T(4,128)}', space=vmem, size = 0x800, scoped, tag = 'scratch operand']
  #allocation4 [shape = 'f32[2,4,32]{2,1,0:T(4,128)}', space=vmem, size = 0x1000, scoped, tag = 'scratch operand']
  %s0 = inlined_call_operand.vmem [shape: f32[2,4,16], index: 0, kind: input, shape index: {}]
  %s1 = inlined_call_operand.vmem [shape: f32[2,1000], index: 1, kind: input, shape index: {}]
  %s2 = inlined_call_operand.vmem [shape: f32[16,128], index: 2, kind: input, shape index: {}]
  %s3 = inlined_call_operand.vmem [shape: f32[32,128], index: 3, kind: input, shape index: {}]
  %s4 = inlined_call_operand.vmem [shape: f32[1,128], index: 4, kind: input, shape index: {}]
  %s5 = inlined_call_operand.vmem [shape: f32[4,32,1000], index: 5, kind: input, shape index: {}]
  %s6 = inlined_call_operand.vmem [shape: f32[1,1000], index: 6, kind: input, shape index: {}]
  %s7 = inlined_call_operand.vmem [shape: f32[1000,8], index: 7, kind: input, shape index: {}]
  %s8 = inlined_call_operand.vmem [shape: f32[1000,8], index: 8, kind: input, shape index: {}]
  %s9 = inlined_call_operand.vmem [shape: f32[1,8], index: 9, kind: input, shape index: {}]
  %s10 = inlined_call_operand.hbm [shape: f32[2,8], index: 10, kind: output, shape index: {}]
  %s11 = sld [smem:[#allocation0]]
  $region50: #{tpu_custom_call.1} parent=0
    _
  %s13 = ssub.s32 1, %s11
  %s14 = scalar_select 0, %s13, %s11
  $region1: #{tpu_custom_call.1} parent=0
    #allocation5 [shape = 'u8[1024]{0}', space=vmem, size = 0x400, scoped, tag = 'output window, operand 0, single buffered']
    #allocation6 [shape = 's32[1]{0}', space=sflag, size = 0x4, scoped, tag = 'scoped memory for tpu_custom_call.1']
    %15 = vsyncpa [#allocation6], 0
    // Predicated region
    $region2: #{tpu_custom_call.1} parent=1 // pred_check
      _
    $region3: #{tpu_custom_call.1} parent=1 // pred_check_branch
      %17 = sbr.rel (0) target = $region5
    $region4: #{tpu_custom_call.1} parent=1 // pred_region
      _
    $region5: #{tpu_custom_call.1} parent=1 // pred_fallthru
      _
    // Predicated region
    $region6: #{tpu_custom_call.1} parent=1 // pred_check
      _
    $region7: #{tpu_custom_call.1} parent=1 // pred_check_branch
      %19 = sbr.rel (0) target = $region9
    $region8: #{tpu_custom_call.1} parent=1 // pred_region
      _
    $region9: #{tpu_custom_call.1} parent=1 // pred_fallthru
      _
    // Predicated region
    $region10: #{tpu_custom_call.1} parent=1 // pred_check
      _
    $region11: #{tpu_custom_call.1} parent=1 // pred_check_branch
      %21 = sbr.rel (0) target = $region13
    $region12: #{tpu_custom_call.1} parent=1 // pred_region
      _
    $region13: #{tpu_custom_call.1} parent=1 // pred_fallthru
      _
    // Predicated region
    $region14: #{tpu_custom_call.1} parent=1 // pred_check
      _
    $region15: #{tpu_custom_call.1} parent=1 // pred_check_branch
      %23 = sbr.rel (0) target = $region17
    $region16: #{tpu_custom_call.1} parent=1 // pred_region
      _
    $region17: #{tpu_custom_call.1} parent=1 // pred_fallthru
      _
    // Predicated region
    $region18: #{tpu_custom_call.1} parent=1 // pred_check
      _
    $region19: #{tpu_custom_call.1} parent=1 // pred_check_branch
      %25 = sbr.rel (0) target = $region21
    $region20: #{tpu_custom_call.1} parent=1 // pred_region
      _
    $region21: #{tpu_custom_call.1} parent=1 // pred_fallthru
      _
    // Predicated region
    $region22: #{tpu_custom_call.1} parent=1 // pred_check
      _
    $region23: #{tpu_custom_call.1} parent=1 // pred_check_branch
      %27 = sbr.rel (0) target = $region25
    $region24: #{tpu_custom_call.1} parent=1 // pred_region
      _
    $region25: #{tpu_custom_call.1} parent=1 // pred_fallthru
      _
    // Predicated region
    $region26: #{tpu_custom_call.1} parent=1 // pred_check
      _
    $region27: #{tpu_custom_call.1} parent=1 // pred_check_branch
      %29 = sbr.rel (0) target = $region29
    $region28: #{tpu_custom_call.1} parent=1 // pred_region
      _
    $region29: #{tpu_custom_call.1} parent=1 // pred_fallthru
      _
    // Predicated region
    $region30: #{tpu_custom_call.1} parent=1 // pred_check
      _
    $region31: #{tpu_custom_call.1} parent=1 // pred_check_branch
      %31 = sbr.rel (0) target = $region33
    $region32: #{tpu_custom_call.1} parent=1 // pred_region
      _
    $region33: #{tpu_custom_call.1} parent=1 // pred_fallthru
      _
    // Predicated region
    $region34: #{tpu_custom_call.1} parent=1 // pred_check
      _
    $region35: #{tpu_custom_call.1} parent=1 // pred_check_branch
      %33 = sbr.rel (0) target = $region37
    $region36: #{tpu_custom_call.1} parent=1 // pred_region
      _
    $region37: #{tpu_custom_call.1} parent=1 // pred_fallthru
      _
    // Predicated region
    $region38: #{tpu_custom_call.1} parent=1 // pred_check
      _
    $region39: #{tpu_custom_call.1} parent=1 // pred_check_branch
      %35 = sbr.rel (0) target = $region41
    $region40: #{tpu_custom_call.1} parent=1 // pred_region
      _
    $region41: #{tpu_custom_call.1} parent=1 // pred_fallthru
      _
    %vm36 = vcmask 257024
    %37 = vst.msk [vmem:[#allocation2] sm:$0xf] %vm36, 0.0
    %38 = vst.msk [vmem:[#allocation3] sm:$0xf] %vm36, 0.0
    %v39 = vld [vmem:[%s0] sm:$0xf]
    %v40 = vld [vmem:[#allocation2] sm:$0xf]
    %v41 = vld [vmem:[%s2] sm:$0xff]
    %v42 = vld [vmem:[%s2 + $0x8] sm:$0xff]
    %v43 = vld [vmem:[%s3] sm:$0xff]
    %v44 = vld [vmem:[%s3 + $0x8] sm:$0xff]
    %v45 = vld [vmem:[%s3 + $0x10] sm:$0xff]
    %v46 = vld [vmem:[%s3 + $0x18] sm:$0xff]
    %vm47 = vcmask 261120
    %v49 = vsel %vm47, %v40, 0
    %51 = vmatprep.subr.mxu0 0.0
    %52 = vmatpush1.msra.mxu0 %v43
    %53 = vmatprep.subr.mxu0 0.0
    %54 = vmatpush1.msra.mxu0 %v44
    %55 = vmatprep.subr.mxu0 0.0
    %56 = vmatpush1.msra.mxu0 %v45
    %57 = vmatprep.subr.mxu0 0.0
    %58 = vmatpush1.msra.mxu0 %v46
    %59 = vmatprep.subr.mxu0 0.0
    %60 = vmatpush1.msra.mxu0 0.0
    %61 = vmatprep.subr.mxu0 0.0
    %62 = vmatpush1.msra.mxu0 0.0
    %63 = vmatprep.subr.mxu0 0.0
    %64 = vmatpush1.msra.mxu0 0.0
    %65 = vmatprep.subr.mxu0 0.0
    %66 = vmatpush1.msra.mxu0 0.0
    %67 = vmatprep.subr.mxu0 0.0
    %68 = vmatpush1.msra.mxu0 0.0
    %69 = vmatprep.subr.mxu0 0.0
    %70 = vmatpush1.msra.mxu0 0.0
    %71 = vmatprep.subr.mxu0 0.0
    %72 = vmatpush1.msra.mxu0 0.0
    %73 = vmatprep.subr.mxu0 0.0
    %74 = vmatpush1.msra.mxu0 0.0
    %75 = vmatprep.subr.mxu0 0.0
    %76 = vmatpush1.msra.mxu0 0.0
    %77 = vmatprep.subr.mxu0 0.0
    %78 = vmatpush1.msra.mxu0 0.0
    %79 = vmatprep.subr.mxu0 0.0
    %80 = vmatpush1.msra.mxu0 0.0
    %81 = vmatprep.subr.mxu0 0.0
    %82 = vmatpush1.msra.mxu0 0.0
    %83 = vmatprep.subr.mxu0 0.0
    %84 = vmatpush1.msra.mxu0 0.0
    %85 = vmatprep.subr.mxu0 0.0
    %86 = vmatpush1.msra.mxu0 0.0
    %87 = vmatprep.subr.mxu0 0.0
    %88 = vmatpush1.msra.mxu0 0.0
    %89 = vmatprep.subr.mxu0 0.0
    %90 = vmatpush1.msra.mxu0 0.0
    %91 = vmatprep.subr.mxu0 0.0
    %92 = vmatpush1.msra.mxu0 0.0
    %93 = vmatprep.subr.mxu0 0.0
    %94 = vmatpush1.msra.mxu0 0.0
    %95 = vmatprep.subr.mxu0 0.0
    %96 = vmatpush1.msra.mxu0 0.0
    %97 = vmatprep.subr.mxu0 0.0
    %98 = vmatpush1.msra.mxu0 0.0
    %99 = vmatprep.subr.mxu0 0.0
    %100 = vmatpush1.msra.mxu0 0.0
    %101 = vmatprep.subr.mxu0 0.0
    %102 = vmatpush1.msra.mxu0 0.0
    %103 = vmatprep.subr.mxu0 0.0
    %104 = vmatpush1.msra.mxu0 0.0
    %105 = vmatprep.subr.mxu0 0.0
    %106 = vmatpush1.msra.mxu0 0.0
    %107 = vmatprep.subr.mxu0 0.0
    %108 = vmatpush1.msra.mxu0 0.0
    %109 = vmatprep.subr.mxu0 0.0
    %110 = vmatpush1.msra.mxu0 0.0
    %111 = vmatprep.subr.mxu0 0.0
    %112 = vmatpush1.msra.mxu0 0.0
    %113 = vmatprep.subr.mxu0 0.0
    %114 = vmatpush1.msra.mxu0 0.0
    %115 = vmatprep.mubr.f32.mxu0 0.0
    %116 = vmatmul.mubr.f32.gmra.mrb[0].mxu0 %v49
    %v117 = vpop.f32.mrb[0].mxu0
    %v118 = vadd.f32 0.0, %v117
    %v119 = vpop.f32.mrb[0].mxu0
    %120 = vdwg.mxu0
    %vm121 = vcmask 130048
    %v123 = vsel %vm121, %v39, 0
    %125 = vmatprep.subr.mxu0 0.0
    %126 = vmatpush1.msra.mxu0 %v41
    %127 = vmatprep.subr.mxu0 0.0
    %128 = vmatpush1.msra.mxu0 %v42
    %129 = vmatprep.subr.mxu0 0.0
    %130 = vmatpush1.msra.mxu0 0.0
    %131 = vmatprep.subr.mxu0 0.0
    %132 = vmatpush1.msra.mxu0 0.0
    %133 = vmatprep.subr.mxu0 0.0
    %134 = vmatpush1.msra.mxu0 0.0
    %135 = vmatprep.subr.mxu0 0.0
    %136 = vmatpush1.msra.mxu0 0.0
    %137 = vmatprep.subr.mxu0 0.0
    %138 = vmatpush1.msra.mxu0 0.0
    %139 = vmatprep.subr.mxu0 0.0
    %140 = vmatpush1.msra.mxu0 0.0
    %141 = vmatprep.subr.mxu0 0.0
    %142 = vmatpush1.msra.mxu0 0.0
    %143 = vmatprep.subr.mxu0 0.0
    %144 = vmatpush1.msra.mxu0 0.0
    %145 = vmatprep.subr.mxu0 0.0
    %146 = vmatpush1.msra.mxu0 0.0
    %147 = vmatprep.subr.mxu0 0.0
    %148 = vmatpush1.msra.mxu0 0.0
    %149 = vmatprep.subr.mxu0 0.0
    %150 = vmatpush1.msra.mxu0 0.0
    %151 = vmatprep.subr.mxu0 0.0
    %152 = vmatpush1.msra.mxu0 0.0
    %153 = vmatprep.subr.mxu0 0.0
    %154 = vmatpush1.msra.mxu0 0.0
    %155 = vmatprep.subr.mxu0 0.0
    %156 = vmatpush1.msra.mxu0 0.0
    %157 = vmatprep.subr.mxu0 0.0
    %158 = vmatpush1.msra.mxu0 0.0
    %159 = vmatprep.subr.mxu0 0.0
    %160 = vmatpush1.msra.mxu0 0.0
    %161 = vmatprep.subr.mxu0 0.0
    %162 = vmatpush1.msra.mxu0 0.0
    %163 = vmatprep.subr.mxu0 0.0
    %164 = vmatpush1.msra.mxu0 0.0
    %165 = vmatprep.subr.mxu0 0.0
    %166 = vmatpush1.msra.mxu0 0.0
    %167 = vmatprep.subr.mxu0 0.0
    %168 = vmatpush1.msra.mxu0 0.0
    %169 = vmatprep.subr.mxu0 0.0
    %170 = vmatpush1.msra.mxu0 0.0
    %171 = vmatprep.subr.mxu0 0.0
    %172 = vmatpush1.msra.mxu0 0.0
    %173 = vmatprep.subr.mxu0 0.0
    %174 = vmatpush1.msra.mxu0 0.0
    %175 = vmatprep.subr.mxu0 0.0
    %176 = vmatpush1.msra.mxu0 0.0
    %177 = vmatprep.subr.mxu0 0.0
    %178 = vmatpush1.msra.mxu0 0.0
    %179 = vmatprep.subr.mxu0 0.0
    %180 = vmatpush1.msra.mxu0 0.0
    %181 = vmatprep.subr.mxu0 0.0
    %182 = vmatpush1.msra.mxu0 0.0
    %183 = vmatprep.subr.mxu0 0.0
    %184 = vmatpush1.msra.mxu0 0.0
    %185 = vmatprep.subr.mxu0 0.0
    %186 = vmatpush1.msra.mxu0 0.0
    %187 = vmatprep.subr.mxu0 0.0
    %188 = vmatpush1.msra.mxu0 0.0
    %189 = vmatprep.mubr.f32.mxu0 0.0
    %190 = vmatmul.mubr.f32.gmra.mrb[0].mxu0 %v123
    %v191 = vpop.f32.mrb[0].mxu0
    %v192 = vadd.f32 %v118, %v191
    %v193 = vpop.f32.mrb[0].mxu0
    %194 = vdwg.mxu0
    %v195 = vld [vmem:[%s4] sm:$0x1]
    %v197 = vlaneseq
    %v198 = vshrl.u32 %v197, 7
    %v199 = vsub.s32 0, %v198
    %v200 = vrot.slane %v195, %v199
    %v202 = vadd.f32 %v192, %v200
    %v203 = vxor.u32 %v202, 2147483648
    %v204 = vmul.f32 %v203, 1.442695
    %v205 = vpow.pop %v204
    %v206 = vadd.f32 %v205, 1.0
    %v207 = vrcp.pop %v206
    %v208 = vmul.f32 1.0, %v207
    %v209 = vtanh.pop %v202
    %v210 = vld [vmem:[#allocation3] sm:$0xf]
    %212 = vrot.lane.b32.xlu0 %v210, 32
    %v213 = vpop.permute.xlu0 %212
    %v215 = vmul.f32 %v208, %v213
    %217 = vrot.lane.b32.xlu0 %v209, 64
    %v218 = vpop.permute.xlu0 %217
    %v220 = vmul.f32 %v208, %v218
    %222 = vrot.lane.b32.xlu0 %v220, 32
    %v223 = vpop.permute.xlu0 %222
    %v225 = vadd.f32 %v215, %v223
    %v226 = vtanh.pop %v225
    %228 = vrot.lane.b32.xlu0 %v226, 64
    %v229 = vpop.permute.xlu0 %228
    %v231 = vmul.f32 %v208, %v229
    %233 = vrot.lane.b32.xlu0 %v225, 96
    %v234 = vpop.permute.xlu0 %233
    %236 = vst.msk [vmem:[#allocation3] sm:$0xf] %vm36, %v234
    %238 = vrot.lane.b32.xlu0 %v231, 32
    %v239 = vpop.permute.xlu0 %238
    %241 = vst.msk [vmem:[#allocation2] sm:$0xf] %vm36, %v239
    %242 = vst.msk [vmem:[#allocation4] sm:$0xf] %vm36, %v239
    %s243 = scalar_lea.vmem %s0, 4
    %v244 = vld [vmem:[%s243] sm:$0xf]
    %v245 = vld [vmem:[#allocation2] sm:$0xf]
    %v246 = vld [vmem:[%s2] sm:$0xff]
    %v247 = vld [vmem:[%s2 + $0x8] sm:$0xff]
    %v248 = vld [vmem:[%s3] sm:$0xff]
    %v249 = vld [vmem:[%s3 + $0x8] sm:$0xff]
    %v250 = vld [vmem:[%s3 + $0x10] sm:$0xff]
    %v251 = vld [vmem:[%s3 + $0x18] sm:$0xff]
    %v253 = vsel %vm47, %v245, 0
    %255 = vmatprep.subr.mxu0 0.0
    %256 = vmatpush1.msra.mxu0 %v248
    %257 = vmatprep.subr.mxu0 0.0
    %258 = vmatpush1.msra.mxu0 %v249
    %259 = vmatprep.subr.mxu0 0.0
    %260 = vmatpush1.msra.mxu0 %v250
    %261 = vmatprep.subr.mxu0 0.0
    %262 = vmatpush1.msra.mxu0 %v251
    %263 = vmatprep.subr.mxu0 0.0
    %264 = vmatpush1.msra.mxu0 0.0
    %265 = vmatprep.subr.mxu0 0.0
    %266 = vmatpush1.msra.mxu0 0.0
    %267 = vmatprep.subr.mxu0 0.0
    %268 = vmatpush1.msra.mxu0 0.0
    %269 = vmatprep.subr.mxu0 0.0
    %270 = vmatpush1.msra.mxu0 0.0
    %271 = vmatprep.subr.mxu0 0.0
    %272 = vmatpush1.msra.mxu0 0.0
    %273 = vmatprep.subr.mxu0 0.0
    %274 = vmatpush1.msra.mxu0 0.0
    %275 = vmatprep.subr.mxu0 0.0
    %276 = vmatpush1.msra.mxu0 0.0
    %277 = vmatprep.subr.mxu0 0.0
    %278 = vmatpush1.msra.mxu0 0.0
    %279 = vmatprep.subr.mxu0 0.0
    %280 = vmatpush1.msra.mxu0 0.0
    %281 = vmatprep.subr.mxu0 0.0
    %282 = vmatpush1.msra.mxu0 0.0
    %283 = vmatprep.subr.mxu0 0.0
    %284 = vmatpush1.msra.mxu0 0.0
    %285 = vmatprep.subr.mxu0 0.0
    %286 = vmatpush1.msra.mxu0 0.0
    %287 = vmatprep.subr.mxu0 0.0
    %288 = vmatpush1.msra.mxu0 0.0
    %289 = vmatprep.subr.mxu0 0.0
    %290 = vmatpush1.msra.mxu0 0.0
    %291 = vmatprep.subr.mxu0 0.0
    %292 = vmatpush1.msra.mxu0 0.0
    %293 = vmatprep.subr.mxu0 0.0
    %294 = vmatpush1.msra.mxu0 0.0
    %295 = vmatprep.subr.mxu0 0.0
    %296 = vmatpush1.msra.mxu0 0.0
    %297 = vmatprep.subr.mxu0 0.0
    %298 = vmatpush1.msra.mxu0 0.0
    %299 = vmatprep.subr.mxu0 0.0
    %300 = vmatpush1.msra.mxu0 0.0
    %301 = vmatprep.subr.mxu0 0.0
    %302 = vmatpush1.msra.mxu0 0.0
    %303 = vmatprep.subr.mxu0 0.0
    %304 = vmatpush1.msra.mxu0 0.0
    %305 = vmatprep.subr.mxu0 0.0
    %306 = vmatpush1.msra.mxu0 0.0
    %307 = vmatprep.subr.mxu0 0.0
    %308 = vmatpush1.msra.mxu0 0.0
    %309 = vmatprep.subr.mxu0 0.0
    %310 = vmatpush1.msra.mxu0 0.0
    %311 = vmatprep.subr.mxu0 0.0
    %312 = vmatpush1.msra.mxu0 0.0
    %313 = vmatprep.subr.mxu0 0.0
    %314 = vmatpush1.msra.mxu0 0.0
    %315 = vmatprep.subr.mxu0 0.0
    %316 = vmatpush1.msra.mxu0 0.0
    %317 = vmatprep.subr.mxu0 0.0
    %318 = vmatpush1.msra.mxu0 0.0
    %319 = vmatprep.mubr.f32.mxu0 0.0
    %320 = vmatmul.mubr.f32.gmra.mrb[0].mxu0 %v253
    %v321 = vpop.f32.mrb[0].mxu0
    %v322 = vadd.f32 0.0, %v321
    %v323 = vpop.f32.mrb[0].mxu0
    %324 = vdwg.mxu0
    %v326 = vsel %vm121, %v244, 0
    %328 = vmatprep.subr.mxu0 0.0
    %329 = vmatpush1.msra.mxu0 %v246
    %330 = vmatprep.subr.mxu0 0.0
    %331 = vmatpush1.msra.mxu0 %v247
    %332 = vmatprep.subr.mxu0 0.0
    %333 = vmatpush1.msra.mxu0 0.0
    %334 = vmatprep.subr.mxu0 0.0
    %335 = vmatpush1.msra.mxu0 0.0
    %336 = vmatprep.subr.mxu0 0.0
    %337 = vmatpush1.msra.mxu0 0.0
    %338 = vmatprep.subr.mxu0 0.0
    %339 = vmatpush1.msra.mxu0 0.0
    %340 = vmatprep.subr.mxu0 0.0
    %341 = vmatpush1.msra.mxu0 0.0
    %342 = vmatprep.subr.mxu0 0.0
    %343 = vmatpush1.msra.mxu0 0.0
    %344 = vmatprep.subr.mxu0 0.0
    %345 = vmatpush1.msra.mxu0 0.0
    %346 = vmatprep.subr.mxu0 0.0
    %347 = vmatpush1.msra.mxu0 0.0
    %348 = vmatprep.subr.mxu0 0.0
    %349 = vmatpush1.msra.mxu0 0.0
    %350 = vmatprep.subr.mxu0 0.0
    %351 = vmatpush1.msra.mxu0 0.0
    %352 = vmatprep.subr.mxu0 0.0
    %353 = vmatpush1.msra.mxu0 0.0
    %354 = vmatprep.subr.mxu0 0.0
    %355 = vmatpush1.msra.mxu0 0.0
    %356 = vmatprep.subr.mxu0 0.0
    %357 = vmatpush1.msra.mxu0 0.0
    %358 = vmatprep.subr.mxu0 0.0
    %359 = vmatpush1.msra.mxu0 0.0
    %360 = vmatprep.subr.mxu0 0.0
    %361 = vmatpush1.msra.mxu0 0.0
    %362 = vmatprep.subr.mxu0 0.0
    %363 = vmatpush1.msra.mxu0 0.0
    %364 = vmatprep.subr.mxu0 0.0
    %365 = vmatpush1.msra.mxu0 0.0
    %366 = vmatprep.subr.mxu0 0.0
    %367 = vmatpush1.msra.mxu0 0.0
    %368 = vmatprep.subr.mxu0 0.0
    %369 = vmatpush1.msra.mxu0 0.0
    %370 = vmatprep.subr.mxu0 0.0
    %371 = vmatpush1.msra.mxu0 0.0
    %372 = vmatprep.subr.mxu0 0.0
    %373 = vmatpush1.msra.mxu0 0.0
    %374 = vmatprep.subr.mxu0 0.0
    %375 = vmatpush1.msra.mxu0 0.0
    %376 = vmatprep.subr.mxu0 0.0
    %377 = vmatpush1.msra.mxu0 0.0
    %378 = vmatprep.subr.mxu0 0.0
    %379 = vmatpush1.msra.mxu0 0.0
    %380 = vmatprep.subr.mxu0 0.0
    %381 = vmatpush1.msra.mxu0 0.0
    %382 = vmatprep.subr.mxu0 0.0
    %383 = vmatpush1.msra.mxu0 0.0
    %384 = vmatprep.subr.mxu0 0.0
    %385 = vmatpush1.msra.mxu0 0.0
    %386 = vmatprep.subr.mxu0 0.0
    %387 = vmatpush1.msra.mxu0 0.0
    %388 = vmatprep.subr.mxu0 0.0
    %389 = vmatpush1.msra.mxu0 0.0
    %390 = vmatprep.subr.mxu0 0.0
    %391 = vmatpush1.msra.mxu0 0.0
    %392 = vmatprep.mubr.f32.mxu0 0.0
    %393 = vmatmul.mubr.f32.gmra.mrb[0].mxu0 %v326
    %v394 = vpop.f32.mrb[0].mxu0
    %v395 = vadd.f32 %v322, %v394
    %v396 = vpop.f32.mrb[0].mxu0
    %397 = vdwg.mxu0
    %v398 = vld [vmem:[%s4] sm:$0x1]
    %v400 = vlaneseq
    %v401 = vshrl.u32 %v400, 7
    %v402 = vsub.s32 0, %v401
    %v403 = vrot.slane %v398, %v402
    %v405 = vadd.f32 %v395, %v403
    %v406 = vxor.u32 %v405, 2147483648
    %v407 = vmul.f32 %v406, 1.442695
    %v408 = vpow.pop %v407
    %v409 = vadd.f32 %v408, 1.0
    %v410 = vrcp.pop %v409
    %v411 = vmul.f32 1.0, %v410
    %v412 = vtanh.pop %v405
    %v413 = vld [vmem:[#allocation3] sm:$0xf]
    %415 = vrot.lane.b32.xlu0 %v413, 32
    %v416 = vpop.permute.xlu0 %415
    %v418 = vmul.f32 %v411, %v416
    %420 = vrot.lane.b32.xlu0 %v412, 64
    %v421 = vpop.permute.xlu0 %420
    %v423 = vmul.f32 %v411, %v421
    %425 = vrot.lane.b32.xlu0 %v423, 32
    %v426 = vpop.permute.xlu0 %425
    %v428 = vadd.f32 %v418, %v426
    %v429 = vtanh.pop %v428
    %431 = vrot.lane.b32.xlu0 %v429, 64
    %v432 = vpop.permute.xlu0 %431
    %v434 = vmul.f32 %v411, %v432
    %436 = vrot.lane.b32.xlu0 %v428, 96
    %v437 = vpop.permute.xlu0 %436
    %439 = vst.msk [vmem:[#allocation3] sm:$0xf] %vm36, %v437
    %441 = vrot.lane.b32.xlu0 %v434, 32
    %v442 = vpop.permute.xlu0 %441
    %444 = vst.msk [vmem:[#allocation2] sm:$0xf] %vm36, %v442
    %s445 = scalar_lea.vmem [#allocation4], 4
    %446 = vst.msk [vmem:[%s445] sm:$0xf] %vm36, %v442
    %v447 = vld [vmem:[%s6] sm:$0xff]
    %v448 = vld [vmem:[#allocation4] sm:$0x1]
    %v449 = vld [vmem:[#allocation4 + $0x4] sm:$0x1]
    %v450 = vld [vmem:[%s5] sm:$0xff]
    %v451 = vld [vmem:[%s5 + $0x8] sm:$0xff]
    %v452 = vld [vmem:[%s5 + $0x10] sm:$0xff]
    %v453 = vld [vmem:[%s5 + $0x18] sm:$0xff]
    %v454 = vld [vmem:[%s5 + $0x20] sm:$0xff]
    %v455 = vld [vmem:[%s5 + $0x28] sm:$0xff]
    %v456 = vld [vmem:[%s5 + $0x30] sm:$0xff]
    %v457 = vld [vmem:[%s5 + $0x38] sm:$0xff]
    %v458 = vld [vmem:[%s5 + $0x40] sm:$0xff]
    %v459 = vld [vmem:[%s5 + $0x48] sm:$0xff]
    %v460 = vld [vmem:[%s5 + $0x50] sm:$0xff]
    %v461 = vld [vmem:[%s5 + $0x58] sm:$0xff]
    %v462 = vld [vmem:[%s5 + $0x60] sm:$0xff]
    %v463 = vld [vmem:[%s5 + $0x68] sm:$0xff]
    %v464 = vld [vmem:[%s5 + $0x70] sm:$0xff]
    %v465 = vld [vmem:[%s5 + $0x78] sm:$0xff]
    %v466 = vld [vmem:[%s5 + $0x80] sm:$0xff]
    %v467 = vld [vmem:[%s5 + $0x88] sm:$0xff]
    %v468 = vld [vmem:[%s5 + $0x90] sm:$0xff]
    %v469 = vld [vmem:[%s5 + $0x98] sm:$0xff]
    %v470 = vld [vmem:[%s5 + $0xa0] sm:$0xff]
    %v471 = vld [vmem:[%s5 + $0xa8] sm:$0xff]
    %v472 = vld [vmem:[%s5 + $0xb0] sm:$0xff]
    %v473 = vld [vmem:[%s5 + $0xb8] sm:$0xff]
    %v474 = vld [vmem:[%s5 + $0xc0] sm:$0xff]
    %v475 = vld [vmem:[%s5 + $0xc8] sm:$0xff]
    %v476 = vld [vmem:[%s5 + $0xd0] sm:$0xff]
    %v477 = vld [vmem:[%s5 + $0xd8] sm:$0xff]
    %v478 = vld [vmem:[%s5 + $0xe0] sm:$0xff]
    %v479 = vld [vmem:[%s5 + $0xe8] sm:$0xff]
    %v480 = vld [vmem:[%s5 + $0xf0] sm:$0xff]
    %v481 = vld [vmem:[%s5 + $0xf8] sm:$0xff]
    %v484 = vrot.slane %v449, 7
    %vm485 = vcmask 1041409
    %v486 = vsel %vm485, %v484, %v448
    %v487 = vsel %vm47, %v486, 0
    %489 = vmatprep.subr.mxu0 %v451
    %490 = vmatpush1.msra.mxu0 %v450
    %491 = vmatprep.subr.mxu0 %v459
    %492 = vmatpush1.msra.mxu0 %v458
    %493 = vmatprep.subr.mxu0 %v467
    %494 = vmatpush1.msra.mxu0 %v466
    %495 = vmatprep.subr.mxu0 %v475
    %496 = vmatpush1.msra.mxu0 %v474
    %497 = vmatprep.subr.mxu0 0.0
    %498 = vmatpush1.msra.mxu0 0.0
    %499 = vmatprep.subr.mxu0 0.0
    %500 = vmatpush1.msra.mxu0 0.0
    %501 = vmatprep.subr.mxu0 0.0
    %502 = vmatpush1.msra.mxu0 0.0
    %503 = vmatprep.subr.mxu0 0.0
    %504 = vmatpush1.msra.mxu0 0.0
    %505 = vmatprep.subr.mxu0 0.0
    %506 = vmatpush1.msra.mxu0 0.0
    %507 = vmatprep.subr.mxu0 0.0
    %508 = vmatpush1.msra.mxu0 0.0
    %509 = vmatprep.subr.mxu0 0.0
    %510 = vmatpush1.msra.mxu0 0.0
    %511 = vmatprep.subr.mxu0 0.0
    %512 = vmatpush1.msra.mxu0 0.0
    %513 = vmatprep.subr.mxu0 0.0
    %514 = vmatpush1.msra.mxu0 0.0
    %515 = vmatprep.subr.mxu0 0.0
    %516 = vmatpush1.msra.mxu0 0.0
    %517 = vmatprep.subr.mxu0 0.0
    %518 = vmatpush1.msra.mxu0 0.0
    %519 = vmatprep.subr.mxu0 0.0
    %520 = vmatpush1.msra.mxu0 0.0
    %521 = vmatprep.subr.mxu0 0.0
    %522 = vmatpush1.msra.mxu0 0.0
    %523 = vmatprep.subr.mxu0 0.0
    %524 = vmatpush1.msra.mxu0 0.0
    %525 = vmatprep.subr.mxu0 0.0
    %526 = vmatpush1.msra.mxu0 0.0
    %527 = vmatprep.subr.mxu0 0.0
    %528 = vmatpush1.msra.mxu0 0.0
    %529 = vmatprep.subr.mxu0 0.0
    %530 = vmatpush1.msra.mxu0 0.0
    %531 = vmatprep.subr.mxu0 0.0
    %532 = vmatpush1.msra.mxu0 0.0
    %533 = vmatprep.subr.mxu0 0.0
    %534 = vmatpush1.msra.mxu0 0.0
    %535 = vmatprep.subr.mxu0 0.0
    %536 = vmatpush1.msra.mxu0 0.0
    %537 = vmatprep.subr.mxu0 0.0
    %538 = vmatpush1.msra.mxu0 0.0
    %539 = vmatprep.subr.mxu0 0.0
    %540 = vmatpush1.msra.mxu0 0.0
    %541 = vmatprep.subr.mxu0 0.0
    %542 = vmatpush1.msra.mxu0 0.0
    %543 = vmatprep.subr.mxu0 0.0
    %544 = vmatpush1.msra.mxu0 0.0
    %545 = vmatprep.subr.mxu0 0.0
    %546 = vmatpush1.msra.mxu0 0.0
    %547 = vmatprep.subr.mxu0 0.0
    %548 = vmatpush1.msra.mxu0 0.0
    %549 = vmatprep.subr.mxu0 0.0
    %550 = vmatpush1.msra.mxu0 0.0
    %551 = vmatprep.subr.mxu0 0.0
    %552 = vmatpush1.msra.mxu0 0.0
    %553 = vmatprep.mubr.f32.mxu0 0.0
    %554 = vmatmul.mubr.f32.gmra.mrb[0].mxu0 %v487
    %v555 = vpop.f32.mrb[0].mxu0
    %v556 = vadd.f32 0.0, %v555
    %v557 = vpop.f32.mrb[0].mxu0
    %v558 = vadd.f32 0.0, %v557
    %559 = vdwg.mxu0
    %560 = vmatprep.subr.mxu0 %v453
    %561 = vmatpush1.msra.mxu0 %v452
    %562 = vmatprep.subr.mxu0 %v461
    %563 = vmatpush1.msra.mxu0 %v460
    %564 = vmatprep.subr.mxu0 %v469
    %565 = vmatpush1.msra.mxu0 %v468
    %566 = vmatprep.subr.mxu0 %v477
    %567 = vmatpush1.msra.mxu0 %v476
    %568 = vmatprep.subr.mxu0 0.0
    %569 = vmatpush1.msra.mxu0 0.0
    %570 = vmatprep.subr.mxu0 0.0
    %571 = vmatpush1.msra.mxu0 0.0
    %572 = vmatprep.subr.mxu0 0.0
    %573 = vmatpush1.msra.mxu0 0.0
    %574 = vmatprep.subr.mxu0 0.0
    %575 = vmatpush1.msra.mxu0 0.0
    %576 = vmatprep.subr.mxu0 0.0
    %577 = vmatpush1.msra.mxu0 0.0
    %578 = vmatprep.subr.mxu0 0.0
    %579 = vmatpush1.msra.mxu0 0.0
    %580 = vmatprep.subr.mxu0 0.0
    %581 = vmatpush1.msra.mxu0 0.0
    %582 = vmatprep.subr.mxu0 0.0
    %583 = vmatpush1.msra.mxu0 0.0
    %584 = vmatprep.subr.mxu0 0.0
    %585 = vmatpush1.msra.mxu0 0.0
    %586 = vmatprep.subr.mxu0 0.0
    %587 = vmatpush1.msra.mxu0 0.0
    %588 = vmatprep.subr.mxu0 0.0
    %589 = vmatpush1.msra.mxu0 0.0
    %590 = vmatprep.subr.mxu0 0.0
    %591 = vmatpush1.msra.mxu0 0.0
    %592 = vmatprep.subr.mxu0 0.0
    %593 = vmatpush1.msra.mxu0 0.0
    %594 = vmatprep.subr.mxu0 0.0
    %595 = vmatpush1.msra.mxu0 0.0
    %596 = vmatprep.subr.mxu0 0.0
    %597 = vmatpush1.msra.mxu0 0.0
    %598 = vmatprep.subr.mxu0 0.0
    %599 = vmatpush1.msra.mxu0 0.0
    %600 = vmatprep.subr.mxu0 0.0
    %601 = vmatpush1.msra.mxu0 0.0
    %602 = vmatprep.subr.mxu0 0.0
    %603 = vmatpush1.msra.mxu0 0.0
    %604 = vmatprep.subr.mxu0 0.0
    %605 = vmatpush1.msra.mxu0 0.0
    %606 = vmatprep.subr.mxu0 0.0
    %607 = vmatpush1.msra.mxu0 0.0
    %608 = vmatprep.subr.mxu0 0.0
    %609 = vmatpush1.msra.mxu0 0.0
    %610 = vmatprep.subr.mxu0 0.0
    %611 = vmatpush1.msra.mxu0 0.0
    %612 = vmatprep.subr.mxu0 0.0
    %613 = vmatpush1.msra.mxu0 0.0
    %614 = vmatprep.subr.mxu0 0.0
    %615 = vmatpush1.msra.mxu0 0.0
    %616 = vmatprep.subr.mxu0 0.0
    %617 = vmatpush1.msra.mxu0 0.0
    %618 = vmatprep.subr.mxu0 0.0
    %619 = vmatpush1.msra.mxu0 0.0
    %620 = vmatprep.subr.mxu0 0.0
    %621 = vmatpush1.msra.mxu0 0.0
    %622 = vmatprep.subr.mxu0 0.0
    %623 = vmatpush1.msra.mxu0 0.0
    %624 = vmatprep.mubr.f32.mxu0 0.0
    %625 = vmatmul.mubr.f32.gmra.mrb[0].mxu0 %v487
    %v626 = vpop.f32.mrb[0].mxu0
    %v627 = vadd.f32 0.0, %v626
    %v628 = vpop.f32.mrb[0].mxu0
    %v629 = vadd.f32 0.0, %v628
    %630 = vdwg.mxu0
    %631 = vmatprep.subr.mxu0 %v455
    %632 = vmatpush1.msra.mxu0 %v454
    %633 = vmatprep.subr.mxu0 %v463
    %634 = vmatpush1.msra.mxu0 %v462
    %635 = vmatprep.subr.mxu0 %v471
    %636 = vmatpush1.msra.mxu0 %v470
    %637 = vmatprep.subr.mxu0 %v479
    %638 = vmatpush1.msra.mxu0 %v478
    %639 = vmatprep.subr.mxu0 0.0
    %640 = vmatpush1.msra.mxu0 0.0
    %641 = vmatprep.subr.mxu0 0.0
    %642 = vmatpush1.msra.mxu0 0.0
    %643 = vmatprep.subr.mxu0 0.0
    %644 = vmatpush1.msra.mxu0 0.0
    %645 = vmatprep.subr.mxu0 0.0
    %646 = vmatpush1.msra.mxu0 0.0
    %647 = vmatprep.subr.mxu0 0.0
    %648 = vmatpush1.msra.mxu0 0.0
    %649 = vmatprep.subr.mxu0 0.0
    %650 = vmatpush1.msra.mxu0 0.0
    %651 = vmatprep.subr.mxu0 0.0
    %652 = vmatpush1.msra.mxu0 0.0
    %653 = vmatprep.subr.mxu0 0.0
    %654 = vmatpush1.msra.mxu0 0.0
    %655 = vmatprep.subr.mxu0 0.0
    %656 = vmatpush1.msra.mxu0 0.0
    %657 = vmatprep.subr.mxu0 0.0
    %658 = vmatpush1.msra.mxu0 0.0
    %659 = vmatprep.subr.mxu0 0.0
    %660 = vmatpush1.msra.mxu0 0.0
    %661 = vmatprep.subr.mxu0 0.0
    %662 = vmatpush1.msra.mxu0 0.0
    %663 = vmatprep.subr.mxu0 0.0
    %664 = vmatpush1.msra.mxu0 0.0
    %665 = vmatprep.subr.mxu0 0.0
    %666 = vmatpush1.msra.mxu0 0.0
    %667 = vmatprep.subr.mxu0 0.0
    %668 = vmatpush1.msra.mxu0 0.0
    %669 = vmatprep.subr.mxu0 0.0
    %670 = vmatpush1.msra.mxu0 0.0
    %671 = vmatprep.subr.mxu0 0.0
    %672 = vmatpush1.msra.mxu0 0.0
    %673 = vmatprep.subr.mxu0 0.0
    %674 = vmatpush1.msra.mxu0 0.0
    %675 = vmatprep.subr.mxu0 0.0
    %676 = vmatpush1.msra.mxu0 0.0
    %677 = vmatprep.subr.mxu0 0.0
    %678 = vmatpush1.msra.mxu0 0.0
    %679 = vmatprep.subr.mxu0 0.0
    %680 = vmatpush1.msra.mxu0 0.0
    %681 = vmatprep.subr.mxu0 0.0
    %682 = vmatpush1.msra.mxu0 0.0
    %683 = vmatprep.subr.mxu0 0.0
    %684 = vmatpush1.msra.mxu0 0.0
    %685 = vmatprep.subr.mxu0 0.0
    %686 = vmatpush1.msra.mxu0 0.0
    %687 = vmatprep.subr.mxu0 0.0
    %688 = vmatpush1.msra.mxu0 0.0
    %689 = vmatprep.subr.mxu0 0.0
    %690 = vmatpush1.msra.mxu0 0.0
    %691 = vmatprep.subr.mxu0 0.0
    %692 = vmatpush1.msra.mxu0 0.0
    %693 = vmatprep.subr.mxu0 0.0
    %694 = vmatpush1.msra.mxu0 0.0
    %695 = vmatprep.mubr.f32.mxu0 0.0
    %696 = vmatmul.mubr.f32.gmra.mrb[0].mxu0 %v487
    %v697 = vpop.f32.mrb[0].mxu0
    %v698 = vadd.f32 0.0, %v697
    %v699 = vpop.f32.mrb[0].mxu0
    %v700 = vadd.f32 0.0, %v699
    %701 = vdwg.mxu0
    %702 = vmatprep.subr.mxu0 %v457
    %703 = vmatpush1.msra.mxu0 %v456
    %704 = vmatprep.subr.mxu0 %v465
    %705 = vmatpush1.msra.mxu0 %v464
    %706 = vmatprep.subr.mxu0 %v473
    %707 = vmatpush1.msra.mxu0 %v472
    %708 = vmatprep.subr.mxu0 %v481
    %709 = vmatpush1.msra.mxu0 %v480
    %710 = vmatprep.subr.mxu0 0.0
    %711 = vmatpush1.msra.mxu0 0.0
    %712 = vmatprep.subr.mxu0 0.0
    %713 = vmatpush1.msra.mxu0 0.0
    %714 = vmatprep.subr.mxu0 0.0
    %715 = vmatpush1.msra.mxu0 0.0
    %716 = vmatprep.subr.mxu0 0.0
    %717 = vmatpush1.msra.mxu0 0.0
    %718 = vmatprep.subr.mxu0 0.0
    %719 = vmatpush1.msra.mxu0 0.0
    %720 = vmatprep.subr.mxu0 0.0
    %721 = vmatpush1.msra.mxu0 0.0
    %722 = vmatprep.subr.mxu0 0.0
    %723 = vmatpush1.msra.mxu0 0.0
    %724 = vmatprep.subr.mxu0 0.0
    %725 = vmatpush1.msra.mxu0 0.0
    %726 = vmatprep.subr.mxu0 0.0
    %727 = vmatpush1.msra.mxu0 0.0
    %728 = vmatprep.subr.mxu0 0.0
    %729 = vmatpush1.msra.mxu0 0.0
    %730 = vmatprep.subr.mxu0 0.0
    %731 = vmatpush1.msra.mxu0 0.0
    %732 = vmatprep.subr.mxu0 0.0
    %733 = vmatpush1.msra.mxu0 0.0
    %734 = vmatprep.subr.mxu0 0.0
    %735 = vmatpush1.msra.mxu0 0.0
    %736 = vmatprep.subr.mxu0 0.0
    %737 = vmatpush1.msra.mxu0 0.0
    %738 = vmatprep.subr.mxu0 0.0
    %739 = vmatpush1.msra.mxu0 0.0
    %740 = vmatprep.subr.mxu0 0.0
    %741 = vmatpush1.msra.mxu0 0.0
    %742 = vmatprep.subr.mxu0 0.0
    %743 = vmatpush1.msra.mxu0 0.0
    %744 = vmatprep.subr.mxu0 0.0
    %745 = vmatpush1.msra.mxu0 0.0
    %746 = vmatprep.subr.mxu0 0.0
    %747 = vmatpush1.msra.mxu0 0.0
    %748 = vmatprep.subr.mxu0 0.0
    %749 = vmatpush1.msra.mxu0 0.0
    %750 = vmatprep.subr.mxu0 0.0
    %751 = vmatpush1.msra.mxu0 0.0
    %752 = vmatprep.subr.mxu0 0.0
    %753 = vmatpush1.msra.mxu0 0.0
    %754 = vmatprep.subr.mxu0 0.0
    %755 = vmatpush1.msra.mxu0 0.0
    %756 = vmatprep.subr.mxu0 0.0
    %757 = vmatpush1.msra.mxu0 0.0
    %758 = vmatprep.subr.mxu0 0.0
    %759 = vmatpush1.msra.mxu0 0.0
    %760 = vmatprep.subr.mxu0 0.0
    %761 = vmatpush1.msra.mxu0 0.0
    %762 = vmatprep.subr.mxu0 0.0
    %763 = vmatpush1.msra.mxu0 0.0
    %764 = vmatprep.subr.mxu0 0.0
    %765 = vmatpush1.msra.mxu0 0.0
    %766 = vmatprep.mubr.f32.mxu0 0.0
    %767 = vmatmul.mubr.f32.gmra.mrb[0].mxu0 %v487
    %v768 = vpop.f32.mrb[0].mxu0
    %v769 = vadd.f32 0.0, %v768
    %v770 = vpop.f32.mrb[0].mxu0
    %v771 = vadd.f32 0.0, %v770
    %772 = vdwg.mxu0
    %v774 = vlaneseq
    %v775 = vshrl.u32 %v774, 7
    %v776 = vsub.s32 0, %v775
    %v777 = vrot.slane %v447, %v776
    %v778 = vlaneseq
    %v779 = vshrl.u32 %v778, 7
    %v780 = vsub.s32 1, %v779
    %v781 = vrot.slane %v447, %v780
    %v782 = vlaneseq
    %v783 = vshrl.u32 %v782, 7
    %v784 = vsub.s32 2, %v783
    %v785 = vrot.slane %v447, %v784
    %v786 = vlaneseq
    %v787 = vshrl.u32 %v786, 7
    %v788 = vsub.s32 3, %v787
    %v789 = vrot.slane %v447, %v788
    %v790 = vlaneseq
    %v791 = vshrl.u32 %v790, 7
    %v792 = vsub.s32 4, %v791
    %v793 = vrot.slane %v447, %v792
    %v794 = vlaneseq
    %v795 = vshrl.u32 %v794, 7
    %v796 = vsub.s32 5, %v795
    %v797 = vrot.slane %v447, %v796
    %v798 = vlaneseq
    %v799 = vshrl.u32 %v798, 7
    %v800 = vsub.s32 6, %v799
    %v801 = vrot.slane %v447, %v800
    %v802 = vlaneseq
    %v803 = vshrl.u32 %v802, 7
    %v804 = vsub.s32 7, %v803
    %v805 = vrot.slane %v447, %v804
    %v814 = vadd.f32 %v777, %v556
    %v815 = vadd.f32 %v781, %v558
    %v816 = vadd.f32 %v785, %v627
    %v817 = vadd.f32 %v789, %v629
    %v818 = vadd.f32 %v793, %v698
    %v819 = vadd.f32 %v797, %v700
    %v820 = vadd.f32 %v801, %v769
    %v821 = vadd.f32 %v805, %v771
    %v822 = vld [vmem:[#allocation4 + $0x1] sm:$0x1]
    %v823 = vld [vmem:[#allocation4 + $0x5] sm:$0x1]
    %s824 = scalar_lea.vmem %s5, 256
    %v825 = vld [vmem:[%s824] sm:$0xff]
    %v826 = vld [vmem:[%s824 + $0x8] sm:$0xff]
    %v827 = vld [vmem:[%s824 + $0x10] sm:$0xff]
    %v828 = vld [vmem:[%s824 + $0x18] sm:$0xff]
    %v829 = vld [vmem:[%s824 + $0x20] sm:$0xff]
    %v830 = vld [vmem:[%s824 + $0x28] sm:$0xff]
    %v831 = vld [vmem:[%s824 + $0x30] sm:$0xff]
    %v832 = vld [vmem:[%s824 + $0x38] sm:$0xff]
    %v833 = vld [vmem:[%s824 + $0x40] sm:$0xff]
    %v834 = vld [vmem:[%s824 + $0x48] sm:$0xff]
    %v835 = vld [vmem:[%s824 + $0x50] sm:$0xff]
    %v836 = vld [vmem:[%s824 + $0x58] sm:$0xff]
    %v837 = vld [vmem:[%s824 + $0x60] sm:$0xff]
    %v838 = vld [vmem:[%s824 + $0x68] sm:$0xff]
    %v839 = vld [vmem:[%s824 + $0x70] sm:$0xff]
    %v840 = vld [vmem:[%s824 + $0x78] sm:$0xff]
    %v841 = vld [vmem:[%s824 + $0x80] sm:$0xff]
    %v842 = vld [vmem:[%s824 + $0x88] sm:$0xff]
    %v843 = vld [vmem:[%s824 + $0x90] sm:$0xff]
    %v844 = vld [vmem:[%s824 + $0x98] sm:$0xff]
    %v845 = vld [vmem:[%s824 + $0xa0] sm:$0xff]
    %v846 = vld [vmem:[%s824 + $0xa8] sm:$0xff]
    %v847 = vld [vmem:[%s824 + $0xb0] sm:$0xff]
    %v848 = vld [vmem:[%s824 + $0xb8] sm:$0xff]
    %v849 = vld [vmem:[%s824 + $0xc0] sm:$0xff]
    %v850 = vld [vmem:[%s824 + $0xc8] sm:$0xff]
    %v851 = vld [vmem:[%s824 + $0xd0] sm:$0xff]
    %v852 = vld [vmem:[%s824 + $0xd8] sm:$0xff]
    %v853 = vld [vmem:[%s824 + $0xe0] sm:$0xff]
    %v854 = vld [vmem:[%s824 + $0xe8] sm:$0xff]
    %v855 = vld [vmem:[%s824 + $0xf0] sm:$0xff]
    %v856 = vld [vmem:[%s824 + $0xf8] sm:$0xff]
    %v859 = vrot.slane %v823, 7
    %v860 = vsel %vm485, %v859, %v822
    %v861 = vsel %vm47, %v860, 0
    %863 = vmatprep.subr.mxu0 %v826
    %864 = vmatpush1.msra.mxu0 %v825
    %865 = vmatprep.subr.mxu0 %v834
    %866 = vmatpush1.msra.mxu0 %v833
    %867 = vmatprep.subr.mxu0 %v842
    %868 = vmatpush1.msra.mxu0 %v841
    %869 = vmatprep.subr.mxu0 %v850
    %870 = vmatpush1.msra.mxu0 %v849
    %871 = vmatprep.subr.mxu0 0.0
    %872 = vmatpush1.msra.mxu0 0.0
    %873 = vmatprep.subr.mxu0 0.0
    %874 = vmatpush1.msra.mxu0 0.0
    %875 = vmatprep.subr.mxu0 0.0
    %876 = vmatpush1.msra.mxu0 0.0
    %877 = vmatprep.subr.mxu0 0.0
    %878 = vmatpush1.msra.mxu0 0.0
    %879 = vmatprep.subr.mxu0 0.0
    %880 = vmatpush1.msra.mxu0 0.0
    %881 = vmatprep.subr.mxu0 0.0
    %882 = vmatpush1.msra.mxu0 0.0
    %883 = vmatprep.subr.mxu0 0.0
    %884 = vmatpush1.msra.mxu0 0.0
    %885 = vmatprep.subr.mxu0 0.0
    %886 = vmatpush1.msra.mxu0 0.0
    %887 = vmatprep.subr.mxu0 0.0
    %888 = vmatpush1.msra.mxu0 0.0
    %889 = vmatprep.subr.mxu0 0.0
    %890 = vmatpush1.msra.mxu0 0.0
    %891 = vmatprep.subr.mxu0 0.0
    %892 = vmatpush1.msra.mxu0 0.0
    %893 = vmatprep.subr.mxu0 0.0
    %894 = vmatpush1.msra.mxu0 0.0
    %895 = vmatprep.subr.mxu0 0.0
    %896 = vmatpush1.msra.mxu0 0.0
    %897 = vmatprep.subr.mxu0 0.0
    %898 = vmatpush1.msra.mxu0 0.0
    %899 = vmatprep.subr.mxu0 0.0
    %900 = vmatpush1.msra.mxu0 0.0
    %901 = vmatprep.subr.mxu0 0.0
    %902 = vmatpush1.msra.mxu0 0.0
    %903 = vmatprep.subr.mxu0 0.0
    %904 = vmatpush1.msra.mxu0 0.0
    %905 = vmatprep.subr.mxu0 0.0
    %906 = vmatpush1.msra.mxu0 0.0
    %907 = vmatprep.subr.mxu0 0.0
    %908 = vmatpush1.msra.mxu0 0.0
    %909 = vmatprep.subr.mxu0 0.0
    %910 = vmatpush1.msra.mxu0 0.0
    %911 = vmatprep.subr.mxu0 0.0
    %912 = vmatpush1.msra.mxu0 0.0
    %913 = vmatprep.subr.mxu0 0.0
    %914 = vmatpush1.msra.mxu0 0.0
    %915 = vmatprep.subr.mxu0 0.0
    %916 = vmatpush1.msra.mxu0 0.0
    %917 = vmatprep.subr.mxu0 0.0
    %918 = vmatpush1.msra.mxu0 0.0
    %919 = vmatprep.subr.mxu0 0.0
    %920 = vmatpush1.msra.mxu0 0.0
    %921 = vmatprep.subr.mxu0 0.0
    %922 = vmatpush1.msra.mxu0 0.0
    %923 = vmatprep.subr.mxu0 0.0
    %924 = vmatpush1.msra.mxu0 0.0
    %925 = vmatprep.subr.mxu0 0.0
    %926 = vmatpush1.msra.mxu0 0.0
    %927 = vmatprep.mubr.f32.mxu0 0.0
    %928 = vmatmul.mubr.f32.gmra.mrb[0].mxu0 %v861
    %v929 = vpop.f32.mrb[0].mxu0
    %v930 = vadd.f32 0.0, %v929
    %v931 = vpop.f32.mrb[0].mxu0
    %v932 = vadd.f32 0.0, %v931
    %933 = vdwg.mxu0
    %934 = vmatprep.subr.mxu0 %v828
    %935 = vmatpush1.msra.mxu0 %v827
    %936 = vmatprep.subr.mxu0 %v836
    %937 = vmatpush1.msra.mxu0 %v835
    %938 = vmatprep.subr.mxu0 %v844
    %939 = vmatpush1.msra.mxu0 %v843
    %940 = vmatprep.subr.mxu0 %v852
    %941 = vmatpush1.msra.mxu0 %v851
    %942 = vmatprep.subr.mxu0 0.0
    %943 = vmatpush1.msra.mxu0 0.0
    %944 = vmatprep.subr.mxu0 0.0
    %945 = vmatpush1.msra.mxu0 0.0
    %946 = vmatprep.subr.mxu0 0.0
    %947 = vmatpush1.msra.mxu0 0.0
    %948 = vmatprep.subr.mxu0 0.0
    %949 = vmatpush1.msra.mxu0 0.0
    %950 = vmatprep.subr.mxu0 0.0
    %951 = vmatpush1.msra.mxu0 0.0
    %952 = vmatprep.subr.mxu0 0.0
    %953 = vmatpush1.msra.mxu0 0.0
    %954 = vmatprep.subr.mxu0 0.0
    %955 = vmatpush1.msra.mxu0 0.0
    %956 = vmatprep.subr.mxu0 0.0
    %957 = vmatpush1.msra.mxu0 0.0
    %958 = vmatprep.subr.mxu0 0.0
    %959 = vmatpush1.msra.mxu0 0.0
    %960 = vmatprep.subr.mxu0 0.0
    %961 = vmatpush1.msra.mxu0 0.0
    %962 = vmatprep.subr.mxu0 0.0
    %963 = vmatpush1.msra.mxu0 0.0
    %964 = vmatprep.subr.mxu0 0.0
    %965 = vmatpush1.msra.mxu0 0.0
    %966 = vmatprep.subr.mxu0 0.0
    %967 = vmatpush1.msra.mxu0 0.0
    %968 = vmatprep.subr.mxu0 0.0
    %969 = vmatpush1.msra.mxu0 0.0
    %970 = vmatprep.subr.mxu0 0.0
    %971 = vmatpush1.msra.mxu0 0.0
    %972 = vmatprep.subr.mxu0 0.0
    %973 = vmatpush1.msra.mxu0 0.0
    %974 = vmatprep.subr.mxu0 0.0
    %975 = vmatpush1.msra.mxu0 0.0
    %976 = vmatprep.subr.mxu0 0.0
    %977 = vmatpush1.msra.mxu0 0.0
    %978 = vmatprep.subr.mxu0 0.0
    %979 = vmatpush1.msra.mxu0 0.0
    %980 = vmatprep.subr.mxu0 0.0
    %981 = vmatpush1.msra.mxu0 0.0
    %982 = vmatprep.subr.mxu0 0.0
    %983 = vmatpush1.msra.mxu0 0.0
    %984 = vmatprep.subr.mxu0 0.0
    %985 = vmatpush1.msra.mxu0 0.0
    %986 = vmatprep.subr.mxu0 0.0
    %987 = vmatpush1.msra.mxu0 0.0
    %988 = vmatprep.subr.mxu0 0.0
    %989 = vmatpush1.msra.mxu0 0.0
    %990 = vmatprep.subr.mxu0 0.0
    %991 = vmatpush1.msra.mxu0 0.0
    %992 = vmatprep.subr.mxu0 0.0
    %993 = vmatpush1.msra.mxu0 0.0
    %994 = vmatprep.subr.mxu0 0.0
    %995 = vmatpush1.msra.mxu0 0.0
    %996 = vmatprep.subr.mxu0 0.0
    %997 = vmatpush1.msra.mxu0 0.0
    %998 = vmatprep.mubr.f32.mxu0 0.0
    %999 = vmatmul.mubr.f32.gmra.mrb[0].mxu0 %v861
    %v1000 = vpop.f32.mrb[0].mxu0
    %v1001 = vadd.f32 0.0, %v1000
    %v1002 = vpop.f32.mrb[0].mxu0
    %v1003 = vadd.f32 0.0, %v1002
    %1004 = vdwg.mxu0
    %1005 = vmatprep.subr.mxu0 %v830
    %1006 = vmatpush1.msra.mxu0 %v829
    %1007 = vmatprep.subr.mxu0 %v838
    %1008 = vmatpush1.msra.mxu0 %v837
    %1009 = vmatprep.subr.mxu0 %v846
    %1010 = vmatpush1.msra.mxu0 %v845
    %1011 = vmatprep.subr.mxu0 %v854
    %1012 = vmatpush1.msra.mxu0 %v853
    %1013 = vmatprep.subr.mxu0 0.0
    %1014 = vmatpush1.msra.mxu0 0.0
    %1015 = vmatprep.subr.mxu0 0.0
    %1016 = vmatpush1.msra.mxu0 0.0
    %1017 = vmatprep.subr.mxu0 0.0
    %1018 = vmatpush1.msra.mxu0 0.0
    %1019 = vmatprep.subr.mxu0 0.0
    %1020 = vmatpush1.msra.mxu0 0.0
    %1021 = vmatprep.subr.mxu0 0.0
    %1022 = vmatpush1.msra.mxu0 0.0
    %1023 = vmatprep.subr.mxu0 0.0
    %1024 = vmatpush1.msra.mxu0 0.0
    %1025 = vmatprep.subr.mxu0 0.0
    %1026 = vmatpush1.msra.mxu0 0.0
    %1027 = vmatprep.subr.mxu0 0.0
    %1028 = vmatpush1.msra.mxu0 0.0
    %1029 = vmatprep.subr.mxu0 0.0
    %1030 = vmatpush1.msra.mxu0 0.0
    %1031 = vmatprep.subr.mxu0 0.0
    %1032 = vmatpush1.msra.mxu0 0.0
    %1033 = vmatprep.subr.mxu0 0.0
    %1034 = vmatpush1.msra.mxu0 0.0
    %1035 = vmatprep.subr.mxu0 0.0
    %1036 = vmatpush1.msra.mxu0 0.0
    %1037 = vmatprep.subr.mxu0 0.0
    %1038 = vmatpush1.msra.mxu0 0.0
    %1039 = vmatprep.subr.mxu0 0.0
    %1040 = vmatpush1.msra.mxu0 0.0
    %1041 = vmatprep.subr.mxu0 0.0
    %1042 = vmatpush1.msra.mxu0 0.0
    %1043 = vmatprep.subr.mxu0 0.0
    %1044 = vmatpush1.msra.mxu0 0.0
    %1045 = vmatprep.subr.mxu0 0.0
    %1046 = vmatpush1.msra.mxu0 0.0
    %1047 = vmatprep.subr.mxu0 0.0
    %1048 = vmatpush1.msra.mxu0 0.0
    %1049 = vmatprep.subr.mxu0 0.0
    %1050 = vmatpush1.msra.mxu0 0.0
    %1051 = vmatprep.subr.mxu0 0.0
    %1052 = vmatpush1.msra.mxu0 0.0
    %1053 = vmatprep.subr.mxu0 0.0
    %1054 = vmatpush1.msra.mxu0 0.0
    %1055 = vmatprep.subr.mxu0 0.0
    %1056 = vmatpush1.msra.mxu0 0.0
    %1057 = vmatprep.subr.mxu0 0.0
    %1058 = vmatpush1.msra.mxu0 0.0
    %1059 = vmatprep.subr.mxu0 0.0
    %1060 = vmatpush1.msra.mxu0 0.0
    %1061 = vmatprep.subr.mxu0 0.0
    %1062 = vmatpush1.msra.mxu0 0.0
    %1063 = vmatprep.subr.mxu0 0.0
    %1064 = vmatpush1.msra.mxu0 0.0
    %1065 = vmatprep.subr.mxu0 0.0
    %1066 = vmatpush1.msra.mxu0 0.0
    %1067 = vmatprep.subr.mxu0 0.0
    %1068 = vmatpush1.msra.mxu0 0.0
    %1069 = vmatprep.mubr.f32.mxu0 0.0
    %1070 = vmatmul.mubr.f32.gmra.mrb[0].mxu0 %v861
    %v1071 = vpop.f32.mrb[0].mxu0
    %v1072 = vadd.f32 0.0, %v1071
    %v1073 = vpop.f32.mrb[0].mxu0
    %v1074 = vadd.f32 0.0, %v1073
    %1075 = vdwg.mxu0
    %1076 = vmatprep.subr.mxu0 %v832
    %1077 = vmatpush1.msra.mxu0 %v831
    %1078 = vmatprep.subr.mxu0 %v840
    %1079 = vmatpush1.msra.mxu0 %v839
    %1080 = vmatprep.subr.mxu0 %v848
    %1081 = vmatpush1.msra.mxu0 %v847
    %1082 = vmatprep.subr.mxu0 %v856
    %1083 = vmatpush1.msra.mxu0 %v855
    %1084 = vmatprep.subr.mxu0 0.0
    %1085 = vmatpush1.msra.mxu0 0.0
    %1086 = vmatprep.subr.mxu0 0.0
    %1087 = vmatpush1.msra.mxu0 0.0
    %1088 = vmatprep.subr.mxu0 0.0
    %1089 = vmatpush1.msra.mxu0 0.0
    %1090 = vmatprep.subr.mxu0 0.0
    %1091 = vmatpush1.msra.mxu0 0.0
    %1092 = vmatprep.subr.mxu0 0.0
    %1093 = vmatpush1.msra.mxu0 0.0
    %1094 = vmatprep.subr.mxu0 0.0
    %1095 = vmatpush1.msra.mxu0 0.0
    %1096 = vmatprep.subr.mxu0 0.0
    %1097 = vmatpush1.msra.mxu0 0.0
    %1098 = vmatprep.subr.mxu0 0.0
    %1099 = vmatpush1.msra.mxu0 0.0
    %1100 = vmatprep.subr.mxu0 0.0
    %1101 = vmatpush1.msra.mxu0 0.0
    %1102 = vmatprep.subr.mxu0 0.0
    %1103 = vmatpush1.msra.mxu0 0.0
    %1104 = vmatprep.subr.mxu0 0.0
    %1105 = vmatpush1.msra.mxu0 0.0
    %1106 = vmatprep.subr.mxu0 0.0
    %1107 = vmatpush1.msra.mxu0 0.0
    %1108 = vmatprep.subr.mxu0 0.0
    %1109 = vmatpush1.msra.mxu0 0.0
    %1110 = vmatprep.subr.mxu0 0.0
    %1111 = vmatpush1.msra.mxu0 0.0
    %1112 = vmatprep.subr.mxu0 0.0
    %1113 = vmatpush1.msra.mxu0 0.0
    %1114 = vmatprep.subr.mxu0 0.0
    %1115 = vmatpush1.msra.mxu0 0.0
    %1116 = vmatprep.subr.mxu0 0.0
    %1117 = vmatpush1.msra.mxu0 0.0
    %1118 = vmatprep.subr.mxu0 0.0
    %1119 = vmatpush1.msra.mxu0 0.0
    %1120 = vmatprep.subr.mxu0 0.0
    %1121 = vmatpush1.msra.mxu0 0.0
    %1122 = vmatprep.subr.mxu0 0.0
    %1123 = vmatpush1.msra.mxu0 0.0
    %1124 = vmatprep.subr.mxu0 0.0
    %1125 = vmatpush1.msra.mxu0 0.0
    %1126 = vmatprep.subr.mxu0 0.0
    %1127 = vmatpush1.msra.mxu0 0.0
    %1128 = vmatprep.subr.mxu0 0.0
    %1129 = vmatpush1.msra.mxu0 0.0
    %1130 = vmatprep.subr.mxu0 0.0
    %1131 = vmatpush1.msra.mxu0 0.0
    %1132 = vmatprep.subr.mxu0 0.0
    %1133 = vmatpush1.msra.mxu0 0.0
    %1134 = vmatprep.subr.mxu0 0.0
    %1135 = vmatpush1.msra.mxu0 0.0
    %1136 = vmatprep.subr.mxu0 0.0
    %1137 = vmatpush1.msra.mxu0 0.0
    %1138 = vmatprep.subr.mxu0 0.0
    %1139 = vmatpush1.msra.mxu0 0.0
    %1140 = vmatprep.mubr.f32.mxu0 0.0
    %1141 = vmatmul.mubr.f32.gmra.mrb[0].mxu0 %v861
    %v1142 = vpop.f32.mrb[0].mxu0
    %v1143 = vadd.f32 0.0, %v1142
    %v1144 = vpop.f32.mrb[0].mxu0
    %v1145 = vadd.f32 0.0, %v1144
    %1146 = vdwg.mxu0
    %v1147 = vadd.f32 %v814, %v930
    %v1148 = vadd.f32 %v815, %v932
    %v1149 = vadd.f32 %v816, %v1001
    %v1150 = vadd.f32 %v817, %v1003
    %v1151 = vadd.f32 %v818, %v1072
    %v1152 = vadd.f32 %v819, %v1074
    %v1153 = vadd.f32 %v820, %v1143
    %v1154 = vadd.f32 %v821, %v1145
    %v1155 = vld [vmem:[#allocation4 + $0x2] sm:$0x1]
    %v1156 = vld [vmem:[#allocation4 + $0x6] sm:$0x1]
    %s1157 = scalar_lea.vmem %s5, 512
    %v1158 = vld [vmem:[%s1157] sm:$0xff]
    %v1159 = vld [vmem:[%s1157 + $0x8] sm:$0xff]
    %v1160 = vld [vmem:[%s1157 + $0x10] sm:$0xff]
    %v1161 = vld [vmem:[%s1157 + $0x18] sm:$0xff]
    %v1162 = vld [vmem:[%s1157 + $0x20] sm:$0xff]
    %v1163 = vld [vmem:[%s1157 + $0x28] sm:$0xff]
    %v1164 = vld [vmem:[%s1157 + $0x30] sm:$0xff]
    %v1165 = vld [vmem:[%s1157 + $0x38] sm:$0xff]
    %v1166 = vld [vmem:[%s1157 + $0x40] sm:$0xff]
    %v1167 = vld [vmem:[%s1157 + $0x48] sm:$0xff]
    %v1168 = vld [vmem:[%s1157 + $0x50] sm:$0xff]
    %v1169 = vld [vmem:[%s1157 + $0x58] sm:$0xff]
    %v1170 = vld [vmem:[%s1157 + $0x60] sm:$0xff]
    %v1171 = vld [vmem:[%s1157 + $0x68] sm:$0xff]
    %v1172 = vld [vmem:[%s1157 + $0x70] sm:$0xff]
    %v1173 = vld [vmem:[%s1157 + $0x78] sm:$0xff]
    %v1174 = vld [vmem:[%s1157 + $0x80] sm:$0xff]
    %v1175 = vld [vmem:[%s1157 + $0x88] sm:$0xff]
    %v1176 = vld [vmem:[%s1157 + $0x90] sm:$0xff]
    %v1177 = vld [vmem:[%s1157 + $0x98] sm:$0xff]
    %v1178 = vld [vmem:[%s1157 + $0xa0] sm:$0xff]
    %v1179 = vld [vmem:[%s1157 + $0xa8] sm:$0xff]
    %v1180 = vld [vmem:[%s1157 + $0xb0] sm:$0xff]
    %v1181 = vld [vmem:[%s1157 + $0xb8] sm:$0xff]
    %v1182 = vld [vmem:[%s1157 + $0xc0] sm:$0xff]
    %v1183 = vld [vmem:[%s1157 + $0xc8] sm:$0xff]
    %v1184 = vld [vmem:[%s1157 + $0xd0] sm:$0xff]
    %v1185 = vld [vmem:[%s1157 + $0xd8] sm:$0xff]
    %v1186 = vld [vmem:[%s1157 + $0xe0] sm:$0xff]
    %v1187 = vld [vmem:[%s1157 + $0xe8] sm:$0xff]
    %v1188 = vld [vmem:[%s1157 + $0xf0] sm:$0xff]
    %v1189 = vld [vmem:[%s1157 + $0xf8] sm:$0xff]
    %v1192 = vrot.slane %v1156, 7
    %v1193 = vsel %vm485, %v1192, %v1155
    %v1194 = vsel %vm47, %v1193, 0
    %1196 = vmatprep.subr.mxu0 %v1159
    %1197 = vmatpush1.msra.mxu0 %v1158
    %1198 = vmatprep.subr.mxu0 %v1167
    %1199 = vmatpush1.msra.mxu0 %v1166
    %1200 = vmatprep.subr.mxu0 %v1175
    %1201 = vmatpush1.msra.mxu0 %v1174
    %1202 = vmatprep.subr.mxu0 %v1183
    %1203 = vmatpush1.msra.mxu0 %v1182
    %1204 = vmatprep.subr.mxu0 0.0
    %1205 = vmatpush1.msra.mxu0 0.0
    %1206 = vmatprep.subr.mxu0 0.0
    %1207 = vmatpush1.msra.mxu0 0.0
    %1208 = vmatprep.subr.mxu0 0.0
    %1209 = vmatpush1.msra.mxu0 0.0
    %1210 = vmatprep.subr.mxu0 0.0
    %1211 = vmatpush1.msra.mxu0 0.0
    %1212 = vmatprep.subr.mxu0 0.0
    %1213 = vmatpush1.msra.mxu0 0.0
    %1214 = vmatprep.subr.mxu0 0.0
    %1215 = vmatpush1.msra.mxu0 0.0
    %1216 = vmatprep.subr.mxu0 0.0
    %1217 = vmatpush1.msra.mxu0 0.0
    %1218 = vmatprep.subr.mxu0 0.0
    %1219 = vmatpush1.msra.mxu0 0.0
    %1220 = vmatprep.subr.mxu0 0.0
    %1221 = vmatpush1.msra.mxu0 0.0
    %1222 = vmatprep.subr.mxu0 0.0
    %1223 = vmatpush1.msra.mxu0 0.0
    %1224 = vmatprep.subr.mxu0 0.0
    %1225 = vmatpush1.msra.mxu0 0.0
    %1226 = vmatprep.subr.mxu0 0.0
    %1227 = vmatpush1.msra.mxu0 0.0
    %1228 = vmatprep.subr.mxu0 0.0
    %1229 = vmatpush1.msra.mxu0 0.0
    %1230 = vmatprep.subr.mxu0 0.0
    %1231 = vmatpush1.msra.mxu0 0.0
    %1232 = vmatprep.subr.mxu0 0.0
    %1233 = vmatpush1.msra.mxu0 0.0
    %1234 = vmatprep.subr.mxu0 0.0
    %1235 = vmatpush1.msra.mxu0 0.0
    %1236 = vmatprep.subr.mxu0 0.0
    %1237 = vmatpush1.msra.mxu0 0.0
    %1238 = vmatprep.subr.mxu0 0.0
    %1239 = vmatpush1.msra.mxu0 0.0
    %1240 = vmatprep.subr.mxu0 0.0
    %1241 = vmatpush1.msra.mxu0 0.0
    %1242 = vmatprep.subr.mxu0 0.0
    %1243 = vmatpush1.msra.mxu0 0.0
    %1244 = vmatprep.subr.mxu0 0.0
    %1245 = vmatpush1.msra.mxu0 0.0
    %1246 = vmatprep.subr.mxu0 0.0
    %1247 = vmatpush1.msra.mxu0 0.0
    %1248 = vmatprep.subr.mxu0 0.0
    %1249 = vmatpush1.msra.mxu0 0.0
    %1250 = vmatprep.subr.mxu0 0.0
    %1251 = vmatpush1.msra.mxu0 0.0
    %1252 = vmatprep.subr.mxu0 0.0
    %1253 = vmatpush1.msra.mxu0 0.0
    %1254 = vmatprep.subr.mxu0 0.0
    %1255 = vmatpush1.msra.mxu0 0.0
    %1256 = vmatprep.subr.mxu0 0.0
    %1257 = vmatpush1.msra.mxu0 0.0
    %1258 = vmatprep.subr.mxu0 0.0
    %1259 = vmatpush1.msra.mxu0 0.0
    %1260 = vmatprep.mubr.f32.mxu0 0.0
    %1261 = vmatmul.mubr.f32.gmra.mrb[0].mxu0 %v1194
    %v1262 = vpop.f32.mrb[0].mxu0
    %v1263 = vadd.f32 0.0, %v1262
    %v1264 = vpop.f32.mrb[0].mxu0
    %v1265 = vadd.f32 0.0, %v1264
    %1266 = vdwg.mxu0
    %1267 = vmatprep.subr.mxu0 %v1161
    %1268 = vmatpush1.msra.mxu0 %v1160
    %1269 = vmatprep.subr.mxu0 %v1169
    %1270 = vmatpush1.msra.mxu0 %v1168
    %1271 = vmatprep.subr.mxu0 %v1177
    %1272 = vmatpush1.msra.mxu0 %v1176
    %1273 = vmatprep.subr.mxu0 %v1185
    %1274 = vmatpush1.msra.mxu0 %v1184
    %1275 = vmatprep.subr.mxu0 0.0
    %1276 = vmatpush1.msra.mxu0 0.0
    %1277 = vmatprep.subr.mxu0 0.0
    %1278 = vmatpush1.msra.mxu0 0.0
    %1279 = vmatprep.subr.mxu0 0.0
    %1280 = vmatpush1.msra.mxu0 0.0
    %1281 = vmatprep.subr.mxu0 0.0
    %1282 = vmatpush1.msra.mxu0 0.0
    %1283 = vmatprep.subr.mxu0 0.0
    %1284 = vmatpush1.msra.mxu0 0.0
    %1285 = vmatprep.subr.mxu0 0.0
    %1286 = vmatpush1.msra.mxu0 0.0
    %1287 = vmatprep.subr.mxu0 0.0
    %1288 = vmatpush1.msra.mxu0 0.0
    %1289 = vmatprep.subr.mxu0 0.0
    %1290 = vmatpush1.msra.mxu0 0.0
    %1291 = vmatprep.subr.mxu0 0.0
    %1292 = vmatpush1.msra.mxu0 0.0
    %1293 = vmatprep.subr.mxu0 0.0
    %1294 = vmatpush1.msra.mxu0 0.0
    %1295 = vmatprep.subr.mxu0 0.0
    %1296 = vmatpush1.msra.mxu0 0.0
    %1297 = vmatprep.subr.mxu0 0.0
    %1298 = vmatpush1.msra.mxu0 0.0
    %1299 = vmatprep.subr.mxu0 0.0
    %1300 = vmatpush1.msra.mxu0 0.0
    %1301 = vmatprep.subr.mxu0 0.0
    %1302 = vmatpush1.msra.mxu0 0.0
    %1303 = vmatprep.subr.mxu0 0.0
    %1304 = vmatpush1.msra.mxu0 0.0
    %1305 = vmatprep.subr.mxu0 0.0
    %1306 = vmatpush1.msra.mxu0 0.0
    %1307 = vmatprep.subr.mxu0 0.0
    %1308 = vmatpush1.msra.mxu0 0.0
    %1309 = vmatprep.subr.mxu0 0.0
    %1310 = vmatpush1.msra.mxu0 0.0
    %1311 = vmatprep.subr.mxu0 0.0
    %1312 = vmatpush1.msra.mxu0 0.0
    %1313 = vmatprep.subr.mxu0 0.0
    %1314 = vmatpush1.msra.mxu0 0.0
    %1315 = vmatprep.subr.mxu0 0.0
    %1316 = vmatpush1.msra.mxu0 0.0
    %1317 = vmatprep.subr.mxu0 0.0
    %1318 = vmatpush1.msra.mxu0 0.0
    %1319 = vmatprep.subr.mxu0 0.0
    %1320 = vmatpush1.msra.mxu0 0.0
    %1321 = vmatprep.subr.mxu0 0.0
    %1322 = vmatpush1.msra.mxu0 0.0
    %1323 = vmatprep.subr.mxu0 0.0
    %1324 = vmatpush1.msra.mxu0 0.0
    %1325 = vmatprep.subr.mxu0 0.0
    %1326 = vmatpush1.msra.mxu0 0.0
    %1327 = vmatprep.subr.mxu0 0.0
    %1328 = vmatpush1.msra.mxu0 0.0
    %1329 = vmatprep.subr.mxu0 0.0
    %1330 = vmatpush1.msra.mxu0 0.0
    %1331 = vmatprep.mubr.f32.mxu0 0.0
    %1332 = vmatmul.mubr.f32.gmra.mrb[0].mxu0 %v1194
    %v1333 = vpop.f32.mrb[0].mxu0
    %v1334 = vadd.f32 0.0, %v1333
    %v1335 = vpop.f32.mrb[0].mxu0
    %v1336 = vadd.f32 0.0, %v1335
    %1337 = vdwg.mxu0
    %1338 = vmatprep.subr.mxu0 %v1163
    %1339 = vmatpush1.msra.mxu0 %v1162
    %1340 = vmatprep.subr.mxu0 %v1171
    %1341 = vmatpush1.msra.mxu0 %v1170
    %1342 = vmatprep.subr.mxu0 %v1179
    %1343 = vmatpush1.msra.mxu0 %v1178
    %1344 = vmatprep.subr.mxu0 %v1187
    %1345 = vmatpush1.msra.mxu0 %v1186
    %1346 = vmatprep.subr.mxu0 0.0
    %1347 = vmatpush1.msra.mxu0 0.0
    %1348 = vmatprep.subr.mxu0 0.0
    %1349 = vmatpush1.msra.mxu0 0.0
    %1350 = vmatprep.subr.mxu0 0.0
    %1351 = vmatpush1.msra.mxu0 0.0
    %1352 = vmatprep.subr.mxu0 0.0
    %1353 = vmatpush1.msra.mxu0 0.0
    %1354 = vmatprep.subr.mxu0 0.0
    %1355 = vmatpush1.msra.mxu0 0.0
    %1356 = vmatprep.subr.mxu0 0.0
    %1357 = vmatpush1.msra.mxu0 0.0
    %1358 = vmatprep.subr.mxu0 0.0
    %1359 = vmatpush1.msra.mxu0 0.0
    %1360 = vmatprep.subr.mxu0 0.0
    %1361 = vmatpush1.msra.mxu0 0.0
    %1362 = vmatprep.subr.mxu0 0.0
    %1363 = vmatpush1.msra.mxu0 0.0
    %1364 = vmatprep.subr.mxu0 0.0
    %1365 = vmatpush1.msra.mxu0 0.0
    %1366 = vmatprep.subr.mxu0 0.0
    %1367 = vmatpush1.msra.mxu0 0.0
    %1368 = vmatprep.subr.mxu0 0.0
    %1369 = vmatpush1.msra.mxu0 0.0
    %1370 = vmatprep.subr.mxu0 0.0
    %1371 = vmatpush1.msra.mxu0 0.0
    %1372 = vmatprep.subr.mxu0 0.0
    %1373 = vmatpush1.msra.mxu0 0.0
    %1374 = vmatprep.subr.mxu0 0.0
    %1375 = vmatpush1.msra.mxu0 0.0
    %1376 = vmatprep.subr.mxu0 0.0
    %1377 = vmatpush1.msra.mxu0 0.0
    %1378 = vmatprep.subr.mxu0 0.0
    %1379 = vmatpush1.msra.mxu0 0.0
    %1380 = vmatprep.subr.mxu0 0.0
    %1381 = vmatpush1.msra.mxu0 0.0
    %1382 = vmatprep.subr.mxu0 0.0
    %1383 = vmatpush1.msra.mxu0 0.0
    %1384 = vmatprep.subr.mxu0 0.0
    %1385 = vmatpush1.msra.mxu0 0.0
    %1386 = vmatprep.subr.mxu0 0.0
    %1387 = vmatpush1.msra.mxu0 0.0
    %1388 = vmatprep.subr.mxu0 0.0
    %1389 = vmatpush1.msra.mxu0 0.0
    %1390 = vmatprep.subr.mxu0 0.0
    %1391 = vmatpush1.msra.mxu0 0.0
    %1392 = vmatprep.subr.mxu0 0.0
    %1393 = vmatpush1.msra.mxu0 0.0
    %1394 = vmatprep.subr.mxu0 0.0
    %1395 = vmatpush1.msra.mxu0 0.0
    %1396 = vmatprep.subr.mxu0 0.0
    %1397 = vmatpush1.msra.mxu0 0.0
    %1398 = vmatprep.subr.mxu0 0.0
    %1399 = vmatpush1.msra.mxu0 0.0
    %1400 = vmatprep.subr.mxu0 0.0
    %1401 = vmatpush1.msra.mxu0 0.0
    %1402 = vmatprep.mubr.f32.mxu0 0.0
    %1403 = vmatmul.mubr.f32.gmra.mrb[0].mxu0 %v1194
    %v1404 = vpop.f32.mrb[0].mxu0
    %v1405 = vadd.f32 0.0, %v1404
    %v1406 = vpop.f32.mrb[0].mxu0
    %v1407 = vadd.f32 0.0, %v1406
    %1408 = vdwg.mxu0
    %1409 = vmatprep.subr.mxu0 %v1165
    %1410 = vmatpush1.msra.mxu0 %v1164
    %1411 = vmatprep.subr.mxu0 %v1173
    %1412 = vmatpush1.msra.mxu0 %v1172
    %1413 = vmatprep.subr.mxu0 %v1181
    %1414 = vmatpush1.msra.mxu0 %v1180
    %1415 = vmatprep.subr.mxu0 %v1189
    %1416 = vmatpush1.msra.mxu0 %v1188
    %1417 = vmatprep.subr.mxu0 0.0
    %1418 = vmatpush1.msra.mxu0 0.0
    %1419 = vmatprep.subr.mxu0 0.0
    %1420 = vmatpush1.msra.mxu0 0.0
    %1421 = vmatprep.subr.mxu0 0.0
    %1422 = vmatpush1.msra.mxu0 0.0
    %1423 = vmatprep.subr.mxu0 0.0
    %1424 = vmatpush1.msra.mxu0 0.0
    %1425 = vmatprep.subr.mxu0 0.0
    %1426 = vmatpush1.msra.mxu0 0.0
    %1427 = vmatprep.subr.mxu0 0.0
    %1428 = vmatpush1.msra.mxu0 0.0
    %1429 = vmatprep.subr.mxu0 0.0
    %1430 = vmatpush1.msra.mxu0 0.0
    %1431 = vmatprep.subr.mxu0 0.0
    %1432 = vmatpush1.msra.mxu0 0.0
    %1433 = vmatprep.subr.mxu0 0.0
    %1434 = vmatpush1.msra.mxu0 0.0
    %1435 = vmatprep.subr.mxu0 0.0
    %1436 = vmatpush1.msra.mxu0 0.0
    %1437 = vmatprep.subr.mxu0 0.0
    %1438 = vmatpush1.msra.mxu0 0.0
    %1439 = vmatprep.subr.mxu0 0.0
    %1440 = vmatpush1.msra.mxu0 0.0
    %1441 = vmatprep.subr.mxu0 0.0
    %1442 = vmatpush1.msra.mxu0 0.0
    %1443 = vmatprep.subr.mxu0 0.0
    %1444 = vmatpush1.msra.mxu0 0.0
    %1445 = vmatprep.subr.mxu0 0.0
    %1446 = vmatpush1.msra.mxu0 0.0
    %1447 = vmatprep.subr.mxu0 0.0
    %1448 = vmatpush1.msra.mxu0 0.0
    %1449 = vmatprep.subr.mxu0 0.0
    %1450 = vmatpush1.msra.mxu0 0.0
    %1451 = vmatprep.subr.mxu0 0.0
    %1452 = vmatpush1.msra.mxu0 0.0
    %1453 = vmatprep.subr.mxu0 0.0
    %1454 = vmatpush1.msra.mxu0 0.0
    %1455 = vmatprep.subr.mxu0 0.0
    %1456 = vmatpush1.msra.mxu0 0.0
    %1457 = vmatprep.subr.mxu0 0.0
    %1458 = vmatpush1.msra.mxu0 0.0
    %1459 = vmatprep.subr.mxu0 0.0
    %1460 = vmatpush1.msra.mxu0 0.0
    %1461 = vmatprep.subr.mxu0 0.0
    %1462 = vmatpush1.msra.mxu0 0.0
    %1463 = vmatprep.subr.mxu0 0.0
    %1464 = vmatpush1.msra.mxu0 0.0
    %1465 = vmatprep.subr.mxu0 0.0
    %1466 = vmatpush1.msra.mxu0 0.0
    %1467 = vmatprep.subr.mxu0 0.0
    %1468 = vmatpush1.msra.mxu0 0.0
    %1469 = vmatprep.subr.mxu0 0.0
    %1470 = vmatpush1.msra.mxu0 0.0
    %1471 = vmatprep.subr.mxu0 0.0
    %1472 = vmatpush1.msra.mxu0 0.0
    %1473 = vmatprep.mubr.f32.mxu0 0.0
    %1474 = vmatmul.mubr.f32.gmra.mrb[0].mxu0 %v1194
    %v1475 = vpop.f32.mrb[0].mxu0
    %v1476 = vadd.f32 0.0, %v1475
    %v1477 = vpop.f32.mrb[0].mxu0
    %v1478 = vadd.f32 0.0, %v1477
    %1479 = vdwg.mxu0
    %v1480 = vadd.f32 %v1147, %v1263
    %v1481 = vadd.f32 %v1148, %v1265
    %v1482 = vadd.f32 %v1149, %v1334
    %v1483 = vadd.f32 %v1150, %v1336
    %v1484 = vadd.f32 %v1151, %v1405
    %v1485 = vadd.f32 %v1152, %v1407
    %v1486 = vadd.f32 %v1153, %v1476
    %v1487 = vadd.f32 %v1154, %v1478
    %v1488 = vld [vmem:[#allocation4 + $0x3] sm:$0x1]
    %v1489 = vld [vmem:[#allocation4 + $0x7] sm:$0x1]
    %s1490 = scalar_lea.vmem %s5, 768
    %v1491 = vld [vmem:[%s1490] sm:$0xff]
    %v1492 = vld [vmem:[%s1490 + $0x8] sm:$0xff]
    %v1493 = vld [vmem:[%s1490 + $0x10] sm:$0xff]
    %v1494 = vld [vmem:[%s1490 + $0x18] sm:$0xff]
    %v1495 = vld [vmem:[%s1490 + $0x20] sm:$0xff]
    %v1496 = vld [vmem:[%s1490 + $0x28] sm:$0xff]
    %v1497 = vld [vmem:[%s1490 + $0x30] sm:$0xff]
    %v1498 = vld [vmem:[%s1490 + $0x38] sm:$0xff]
    %v1499 = vld [vmem:[%s1490 + $0x40] sm:$0xff]
    %v1500 = vld [vmem:[%s1490 + $0x48] sm:$0xff]
    %v1501 = vld [vmem:[%s1490 + $0x50] sm:$0xff]
    %v1502 = vld [vmem:[%s1490 + $0x58] sm:$0xff]
    %v1503 = vld [vmem:[%s1490 + $0x60] sm:$0xff]
    %v1504 = vld [vmem:[%s1490 + $0x68] sm:$0xff]
    %v1505 = vld [vmem:[%s1490 + $0x70] sm:$0xff]
    %v1506 = vld [vmem:[%s1490 + $0x78] sm:$0xff]
    %v1507 = vld [vmem:[%s1490 + $0x80] sm:$0xff]
    %v1508 = vld [vmem:[%s1490 + $0x88] sm:$0xff]
    %v1509 = vld [vmem:[%s1490 + $0x90] sm:$0xff]
    %v1510 = vld [vmem:[%s1490 + $0x98] sm:$0xff]
    %v1511 = vld [vmem:[%s1490 + $0xa0] sm:$0xff]
    %v1512 = vld [vmem:[%s1490 + $0xa8] sm:$0xff]
    %v1513 = vld [vmem:[%s1490 + $0xb0] sm:$0xff]
    %v1514 = vld [vmem:[%s1490 + $0xb8] sm:$0xff]
    %v1515 = vld [vmem:[%s1490 + $0xc0] sm:$0xff]
    %v1516 = vld [vmem:[%s1490 + $0xc8] sm:$0xff]
    %v1517 = vld [vmem:[%s1490 + $0xd0] sm:$0xff]
    %v1518 = vld [vmem:[%s1490 + $0xd8] sm:$0xff]
    %v1519 = vld [vmem:[%s1490 + $0xe0] sm:$0xff]
    %v1520 = vld [vmem:[%s1490 + $0xe8] sm:$0xff]
    %v1521 = vld [vmem:[%s1490 + $0xf0] sm:$0xff]
    %v1522 = vld [vmem:[%s1490 + $0xf8] sm:$0xff]
    %v1525 = vrot.slane %v1489, 7
    %v1526 = vsel %vm485, %v1525, %v1488
    %v1527 = vsel %vm47, %v1526, 0
    %1529 = vmatprep.subr.mxu0 %v1492
    %1530 = vmatpush1.msra.mxu0 %v1491
    %1531 = vmatprep.subr.mxu0 %v1500
    %1532 = vmatpush1.msra.mxu0 %v1499
    %1533 = vmatprep.subr.mxu0 %v1508
    %1534 = vmatpush1.msra.mxu0 %v1507
    %1535 = vmatprep.subr.mxu0 %v1516
    %1536 = vmatpush1.msra.mxu0 %v1515
    %1537 = vmatprep.subr.mxu0 0.0
    %1538 = vmatpush1.msra.mxu0 0.0
    %1539 = vmatprep.subr.mxu0 0.0
    %1540 = vmatpush1.msra.mxu0 0.0
    %1541 = vmatprep.subr.mxu0 0.0
    %1542 = vmatpush1.msra.mxu0 0.0
    %1543 = vmatprep.subr.mxu0 0.0
    %1544 = vmatpush1.msra.mxu0 0.0
    %1545 = vmatprep.subr.mxu0 0.0
    %1546 = vmatpush1.msra.mxu0 0.0
    %1547 = vmatprep.subr.mxu0 0.0
    %1548 = vmatpush1.msra.mxu0 0.0
    %1549 = vmatprep.subr.mxu0 0.0
    %1550 = vmatpush1.msra.mxu0 0.0
    %1551 = vmatprep.subr.mxu0 0.0
    %1552 = vmatpush1.msra.mxu0 0.0
    %1553 = vmatprep.subr.mxu0 0.0
    %1554 = vmatpush1.msra.mxu0 0.0
    %1555 = vmatprep.subr.mxu0 0.0
    %1556 = vmatpush1.msra.mxu0 0.0
    %1557 = vmatprep.subr.mxu0 0.0
    %1558 = vmatpush1.msra.mxu0 0.0
    %1559 = vmatprep.subr.mxu0 0.0
    %1560 = vmatpush1.msra.mxu0 0.0
    %1561 = vmatprep.subr.mxu0 0.0
    %1562 = vmatpush1.msra.mxu0 0.0
    %1563 = vmatprep.subr.mxu0 0.0
    %1564 = vmatpush1.msra.mxu0 0.0
    %1565 = vmatprep.subr.mxu0 0.0
    %1566 = vmatpush1.msra.mxu0 0.0
    %1567 = vmatprep.subr.mxu0 0.0
    %1568 = vmatpush1.msra.mxu0 0.0
    %1569 = vmatprep.subr.mxu0 0.0
    %1570 = vmatpush1.msra.mxu0 0.0
    %1571 = vmatprep.subr.mxu0 0.0
    %1572 = vmatpush1.msra.mxu0 0.0
    %1573 = vmatprep.subr.mxu0 0.0
    %1574 = vmatpush1.msra.mxu0 0.0
    %1575 = vmatprep.subr.mxu0 0.0
    %1576 = vmatpush1.msra.mxu0 0.0
    %1577 = vmatprep.subr.mxu0 0.0
    %1578 = vmatpush1.msra.mxu0 0.0
    %1579 = vmatprep.subr.mxu0 0.0
    %1580 = vmatpush1.msra.mxu0 0.0
    %1581 = vmatprep.subr.mxu0 0.0
    %1582 = vmatpush1.msra.mxu0 0.0
    %1583 = vmatprep.subr.mxu0 0.0
    %1584 = vmatpush1.msra.mxu0 0.0
    %1585 = vmatprep.subr.mxu0 0.0
    %1586 = vmatpush1.msra.mxu0 0.0
    %1587 = vmatprep.subr.mxu0 0.0
    %1588 = vmatpush1.msra.mxu0 0.0
    %1589 = vmatprep.subr.mxu0 0.0
    %1590 = vmatpush1.msra.mxu0 0.0
    %1591 = vmatprep.subr.mxu0 0.0
    %1592 = vmatpush1.msra.mxu0 0.0
    %1593 = vmatprep.mubr.f32.mxu0 0.0
    %1594 = vmatmul.mubr.f32.gmra.mrb[0].mxu0 %v1527
    %v1595 = vpop.f32.mrb[0].mxu0
    %v1596 = vadd.f32 0.0, %v1595
    %v1597 = vpop.f32.mrb[0].mxu0
    %v1598 = vadd.f32 0.0, %v1597
    %1599 = vdwg.mxu0
    %1600 = vmatprep.subr.mxu0 %v1494
    %1601 = vmatpush1.msra.mxu0 %v1493
    %1602 = vmatprep.subr.mxu0 %v1502
    %1603 = vmatpush1.msra.mxu0 %v1501
    %1604 = vmatprep.subr.mxu0 %v1510
    %1605 = vmatpush1.msra.mxu0 %v1509
    %1606 = vmatprep.subr.mxu0 %v1518
    %1607 = vmatpush1.msra.mxu0 %v1517
    %1608 = vmatprep.subr.mxu0 0.0
    %1609 = vmatpush1.msra.mxu0 0.0
    %1610 = vmatprep.subr.mxu0 0.0
    %1611 = vmatpush1.msra.mxu0 0.0
    %1612 = vmatprep.subr.mxu0 0.0
    %1613 = vmatpush1.msra.mxu0 0.0
    %1614 = vmatprep.subr.mxu0 0.0
    %1615 = vmatpush1.msra.mxu0 0.0
    %1616 = vmatprep.subr.mxu0 0.0
    %1617 = vmatpush1.msra.mxu0 0.0
    %1618 = vmatprep.subr.mxu0 0.0
    %1619 = vmatpush1.msra.mxu0 0.0
    %1620 = vmatprep.subr.mxu0 0.0
    %1621 = vmatpush1.msra.mxu0 0.0
    %1622 = vmatprep.subr.mxu0 0.0
    %1623 = vmatpush1.msra.mxu0 0.0
    %1624 = vmatprep.subr.mxu0 0.0
    %1625 = vmatpush1.msra.mxu0 0.0
    %1626 = vmatprep.subr.mxu0 0.0
    %1627 = vmatpush1.msra.mxu0 0.0
    %1628 = vmatprep.subr.mxu0 0.0
    %1629 = vmatpush1.msra.mxu0 0.0
    %1630 = vmatprep.subr.mxu0 0.0
    %1631 = vmatpush1.msra.mxu0 0.0
    %1632 = vmatprep.subr.mxu0 0.0
    %1633 = vmatpush1.msra.mxu0 0.0
    %1634 = vmatprep.subr.mxu0 0.0
    %1635 = vmatpush1.msra.mxu0 0.0
    %1636 = vmatprep.subr.mxu0 0.0
    %1637 = vmatpush1.msra.mxu0 0.0
    %1638 = vmatprep.subr.mxu0 0.0
    %1639 = vmatpush1.msra.mxu0 0.0
    %1640 = vmatprep.subr.mxu0 0.0
    %1641 = vmatpush1.msra.mxu0 0.0
    %1642 = vmatprep.subr.mxu0 0.0
    %1643 = vmatpush1.msra.mxu0 0.0
    %1644 = vmatprep.subr.mxu0 0.0
    %1645 = vmatpush1.msra.mxu0 0.0
    %1646 = vmatprep.subr.mxu0 0.0
    %1647 = vmatpush1.msra.mxu0 0.0
    %1648 = vmatprep.subr.mxu0 0.0
    %1649 = vmatpush1.msra.mxu0 0.0
    %1650 = vmatprep.subr.mxu0 0.0
    %1651 = vmatpush1.msra.mxu0 0.0
    %1652 = vmatprep.subr.mxu0 0.0
    %1653 = vmatpush1.msra.mxu0 0.0
    %1654 = vmatprep.subr.mxu0 0.0
    %1655 = vmatpush1.msra.mxu0 0.0
    %1656 = vmatprep.subr.mxu0 0.0
    %1657 = vmatpush1.msra.mxu0 0.0
    %1658 = vmatprep.subr.mxu0 0.0
    %1659 = vmatpush1.msra.mxu0 0.0
    %1660 = vmatprep.subr.mxu0 0.0
    %1661 = vmatpush1.msra.mxu0 0.0
    %1662 = vmatprep.subr.mxu0 0.0
    %1663 = vmatpush1.msra.mxu0 0.0
    %1664 = vmatprep.mubr.f32.mxu0 0.0
    %1665 = vmatmul.mubr.f32.gmra.mrb[0].mxu0 %v1527
    %v1666 = vpop.f32.mrb[0].mxu0
    %v1667 = vadd.f32 0.0, %v1666
    %v1668 = vpop.f32.mrb[0].mxu0
    %v1669 = vadd.f32 0.0, %v1668
    %1670 = vdwg.mxu0
    %1671 = vmatprep.subr.mxu0 %v1496
    %1672 = vmatpush1.msra.mxu0 %v1495
    %1673 = vmatprep.subr.mxu0 %v1504
    %1674 = vmatpush1.msra.mxu0 %v1503
    %1675 = vmatprep.subr.mxu0 %v1512
    %1676 = vmatpush1.msra.mxu0 %v1511
    %1677 = vmatprep.subr.mxu0 %v1520
    %1678 = vmatpush1.msra.mxu0 %v1519
    %1679 = vmatprep.subr.mxu0 0.0
    %1680 = vmatpush1.msra.mxu0 0.0
    %1681 = vmatprep.subr.mxu0 0.0
    %1682 = vmatpush1.msra.mxu0 0.0
    %1683 = vmatprep.subr.mxu0 0.0
    %1684 = vmatpush1.msra.mxu0 0.0
    %1685 = vmatprep.subr.mxu0 0.0
    %1686 = vmatpush1.msra.mxu0 0.0
    %1687 = vmatprep.subr.mxu0 0.0
    %1688 = vmatpush1.msra.mxu0 0.0
    %1689 = vmatprep.subr.mxu0 0.0
    %1690 = vmatpush1.msra.mxu0 0.0
    %1691 = vmatprep.subr.mxu0 0.0
    %1692 = vmatpush1.msra.mxu0 0.0
    %1693 = vmatprep.subr.mxu0 0.0
    %1694 = vmatpush1.msra.mxu0 0.0
    %1695 = vmatprep.subr.mxu0 0.0
    %1696 = vmatpush1.msra.mxu0 0.0
    %1697 = vmatprep.subr.mxu0 0.0
    %1698 = vmatpush1.msra.mxu0 0.0
    %1699 = vmatprep.subr.mxu0 0.0
    %1700 = vmatpush1.msra.mxu0 0.0
    %1701 = vmatprep.subr.mxu0 0.0
    %1702 = vmatpush1.msra.mxu0 0.0
    %1703 = vmatprep.subr.mxu0 0.0
    %1704 = vmatpush1.msra.mxu0 0.0
    %1705 = vmatprep.subr.mxu0 0.0
    %1706 = vmatpush1.msra.mxu0 0.0
    %1707 = vmatprep.subr.mxu0 0.0
    %1708 = vmatpush1.msra.mxu0 0.0
    %1709 = vmatprep.subr.mxu0 0.0
    %1710 = vmatpush1.msra.mxu0 0.0
    %1711 = vmatprep.subr.mxu0 0.0
    %1712 = vmatpush1.msra.mxu0 0.0
    %1713 = vmatprep.subr.mxu0 0.0
    %1714 = vmatpush1.msra.mxu0 0.0
    %1715 = vmatprep.subr.mxu0 0.0
    %1716 = vmatpush1.msra.mxu0 0.0
    %1717 = vmatprep.subr.mxu0 0.0
    %1718 = vmatpush1.msra.mxu0 0.0
    %1719 = vmatprep.subr.mxu0 0.0
    %1720 = vmatpush1.msra.mxu0 0.0
    %1721 = vmatprep.subr.mxu0 0.0
    %1722 = vmatpush1.msra.mxu0 0.0
    %1723 = vmatprep.subr.mxu0 0.0
    %1724 = vmatpush1.msra.mxu0 0.0
    %1725 = vmatprep.subr.mxu0 0.0
    %1726 = vmatpush1.msra.mxu0 0.0
    %1727 = vmatprep.subr.mxu0 0.0
    %1728 = vmatpush1.msra.mxu0 0.0
    %1729 = vmatprep.subr.mxu0 0.0
    %1730 = vmatpush1.msra.mxu0 0.0
    %1731 = vmatprep.subr.mxu0 0.0
    %1732 = vmatpush1.msra.mxu0 0.0
    %1733 = vmatprep.subr.mxu0 0.0
    %1734 = vmatpush1.msra.mxu0 0.0
    %1735 = vmatprep.mubr.f32.mxu0 0.0
    %1736 = vmatmul.mubr.f32.gmra.mrb[0].mxu0 %v1527
    %v1737 = vpop.f32.mrb[0].mxu0
    %v1738 = vadd.f32 0.0, %v1737
    %v1739 = vpop.f32.mrb[0].mxu0
    %v1740 = vadd.f32 0.0, %v1739
    %1741 = vdwg.mxu0
    %1742 = vmatprep.subr.mxu0 %v1498
    %1743 = vmatpush1.msra.mxu0 %v1497
    %1744 = vmatprep.subr.mxu0 %v1506
    %1745 = vmatpush1.msra.mxu0 %v1505
    %1746 = vmatprep.subr.mxu0 %v1514
    %1747 = vmatpush1.msra.mxu0 %v1513
    %1748 = vmatprep.subr.mxu0 %v1522
    %1749 = vmatpush1.msra.mxu0 %v1521
    %1750 = vmatprep.subr.mxu0 0.0
    %1751 = vmatpush1.msra.mxu0 0.0
    %1752 = vmatprep.subr.mxu0 0.0
    %1753 = vmatpush1.msra.mxu0 0.0
    %1754 = vmatprep.subr.mxu0 0.0
    %1755 = vmatpush1.msra.mxu0 0.0
    %1756 = vmatprep.subr.mxu0 0.0
    %1757 = vmatpush1.msra.mxu0 0.0
    %1758 = vmatprep.subr.mxu0 0.0
    %1759 = vmatpush1.msra.mxu0 0.0
    %1760 = vmatprep.subr.mxu0 0.0
    %1761 = vmatpush1.msra.mxu0 0.0
    %1762 = vmatprep.subr.mxu0 0.0
    %1763 = vmatpush1.msra.mxu0 0.0
    %1764 = vmatprep.subr.mxu0 0.0
    %1765 = vmatpush1.msra.mxu0 0.0
    %1766 = vmatprep.subr.mxu0 0.0
    %1767 = vmatpush1.msra.mxu0 0.0
    %1768 = vmatprep.subr.mxu0 0.0
    %1769 = vmatpush1.msra.mxu0 0.0
    %1770 = vmatprep.subr.mxu0 0.0
    %1771 = vmatpush1.msra.mxu0 0.0
    %1772 = vmatprep.subr.mxu0 0.0
    %1773 = vmatpush1.msra.mxu0 0.0
    %1774 = vmatprep.subr.mxu0 0.0
    %1775 = vmatpush1.msra.mxu0 0.0
    %1776 = vmatprep.subr.mxu0 0.0
    %1777 = vmatpush1.msra.mxu0 0.0
    %1778 = vmatprep.subr.mxu0 0.0
    %1779 = vmatpush1.msra.mxu0 0.0
    %1780 = vmatprep.subr.mxu0 0.0
    %1781 = vmatpush1.msra.mxu0 0.0
    %1782 = vmatprep.subr.mxu0 0.0
    %1783 = vmatpush1.msra.mxu0 0.0
    %1784 = vmatprep.subr.mxu0 0.0
    %1785 = vmatpush1.msra.mxu0 0.0
    %1786 = vmatprep.subr.mxu0 0.0
    %1787 = vmatpush1.msra.mxu0 0.0
    %1788 = vmatprep.subr.mxu0 0.0
    %1789 = vmatpush1.msra.mxu0 0.0
    %1790 = vmatprep.subr.mxu0 0.0
    %1791 = vmatpush1.msra.mxu0 0.0
    %1792 = vmatprep.subr.mxu0 0.0
    %1793 = vmatpush1.msra.mxu0 0.0
    %1794 = vmatprep.subr.mxu0 0.0
    %1795 = vmatpush1.msra.mxu0 0.0
    %1796 = vmatprep.subr.mxu0 0.0
    %1797 = vmatpush1.msra.mxu0 0.0
    %1798 = vmatprep.subr.mxu0 0.0
    %1799 = vmatpush1.msra.mxu0 0.0
    %1800 = vmatprep.subr.mxu0 0.0
    %1801 = vmatpush1.msra.mxu0 0.0
    %1802 = vmatprep.subr.mxu0 0.0
    %1803 = vmatpush1.msra.mxu0 0.0
    %1804 = vmatprep.subr.mxu0 0.0
    %1805 = vmatpush1.msra.mxu0 0.0
    %1806 = vmatprep.mubr.f32.mxu0 0.0
    %1807 = vmatmul.mubr.f32.gmra.mrb[0].mxu0 %v1527
    %v1808 = vpop.f32.mrb[0].mxu0
    %v1809 = vadd.f32 0.0, %v1808
    %v1810 = vpop.f32.mrb[0].mxu0
    %v1811 = vadd.f32 0.0, %v1810
    %1812 = vdwg.mxu0
    %v1813 = vadd.f32 %v1480, %v1596
    %v1814 = vadd.f32 %v1481, %v1598
    %v1815 = vadd.f32 %v1482, %v1667
    %v1816 = vadd.f32 %v1483, %v1669
    %v1817 = vadd.f32 %v1484, %v1738
    %v1818 = vadd.f32 %v1485, %v1740
    %v1819 = vadd.f32 %v1486, %v1809
    %v1820 = vadd.f32 %v1487, %v1811
    %v1821 = vld [vmem:[%s1] sm:$0xff]
    %v1822 = vld [vmem:[%s1 + $0x8] sm:$0xff]
    %v1823 = vld [vmem:[%s7] sm:$0xff]
    %v1824 = vld [vmem:[%s7 + $0x8] sm:$0xff]
    %v1825 = vld [vmem:[%s7 + $0x10] sm:$0xff]
    %v1826 = vld [vmem:[%s7 + $0x18] sm:$0xff]
    %v1827 = vld [vmem:[%s7 + $0x20] sm:$0xff]
    %v1828 = vld [vmem:[%s7 + $0x28] sm:$0xff]
    %v1829 = vld [vmem:[%s7 + $0x30] sm:$0xff]
    %v1830 = vld [vmem:[%s7 + $0x38] sm:$0xff]
    %v1831 = vld [vmem:[%s7 + $0x40] sm:$0xff]
    %v1832 = vld [vmem:[%s7 + $0x48] sm:$0xff]
    %v1833 = vld [vmem:[%s7 + $0x50] sm:$0xff]
    %v1834 = vld [vmem:[%s7 + $0x58] sm:$0xff]
    %v1835 = vld [vmem:[%s7 + $0x60] sm:$0xff]
    %v1836 = vld [vmem:[%s7 + $0x68] sm:$0xff]
    %v1837 = vld [vmem:[%s7 + $0x70] sm:$0xff]
    %v1838 = vld [vmem:[%s7 + $0x78] sm:$0xff]
    %v1839 = vld [vmem:[%s7 + $0x80] sm:$0xff]
    %v1840 = vld [vmem:[%s7 + $0x88] sm:$0xff]
    %v1841 = vld [vmem:[%s7 + $0x90] sm:$0xff]
    %v1842 = vld [vmem:[%s7 + $0x98] sm:$0xff]
    %v1843 = vld [vmem:[%s7 + $0xa0] sm:$0xff]
    %v1844 = vld [vmem:[%s7 + $0xa8] sm:$0xff]
    %v1845 = vld [vmem:[%s7 + $0xb0] sm:$0xff]
    %v1846 = vld [vmem:[%s7 + $0xb8] sm:$0xff]
    %v1847 = vld [vmem:[%s7 + $0xc0] sm:$0xff]
    %v1848 = vld [vmem:[%s7 + $0xc8] sm:$0xff]
    %v1849 = vld [vmem:[%s7 + $0xd0] sm:$0xff]
    %v1850 = vld [vmem:[%s7 + $0xd8] sm:$0xff]
    %v1851 = vld [vmem:[%s7 + $0xe0] sm:$0xff]
    %v1852 = vld [vmem:[%s7 + $0xe8] sm:$0xff]
    %v1853 = vld [vmem:[%s7 + $0xf0] sm:$0xff]
    %v1854 = vld [vmem:[%s7 + $0xf8] sm:$0xff]
    %v1855 = vld [vmem:[%s7 + $0x100] sm:$0xff]
    %v1856 = vld [vmem:[%s7 + $0x108] sm:$0xff]
    %v1857 = vld [vmem:[%s7 + $0x110] sm:$0xff]
    %v1858 = vld [vmem:[%s7 + $0x118] sm:$0xff]
    %v1859 = vld [vmem:[%s7 + $0x120] sm:$0xff]
    %v1860 = vld [vmem:[%s7 + $0x128] sm:$0xff]
    %v1861 = vld [vmem:[%s7 + $0x130] sm:$0xff]
    %v1862 = vld [vmem:[%s7 + $0x138] sm:$0xff]
    %v1863 = vld [vmem:[%s7 + $0x140] sm:$0xff]
    %v1864 = vld [vmem:[%s7 + $0x148] sm:$0xff]
    %v1865 = vld [vmem:[%s7 + $0x150] sm:$0xff]
    %v1866 = vld [vmem:[%s7 + $0x158] sm:$0xff]
    %v1867 = vld [vmem:[%s7 + $0x160] sm:$0xff]
    %v1868 = vld [vmem:[%s7 + $0x168] sm:$0xff]
    %v1869 = vld [vmem:[%s7 + $0x170] sm:$0xff]
    %v1870 = vld [vmem:[%s7 + $0x178] sm:$0xff]
    %v1871 = vld [vmem:[%s7 + $0x180] sm:$0xff]
    %v1872 = vld [vmem:[%s7 + $0x188] sm:$0xff]
    %v1873 = vld [vmem:[%s7 + $0x190] sm:$0xff]
    %v1874 = vld [vmem:[%s7 + $0x198] sm:$0xff]
    %v1875 = vld [vmem:[%s7 + $0x1a0] sm:$0xff]
    %v1876 = vld [vmem:[%s7 + $0x1a8] sm:$0xff]
    %v1877 = vld [vmem:[%s7 + $0x1b0] sm:$0xff]
    %v1878 = vld [vmem:[%s7 + $0x1b8] sm:$0xff]
    %v1879 = vld [vmem:[%s7 + $0x1c0] sm:$0xff]
    %v1880 = vld [vmem:[%s7 + $0x1c8] sm:$0xff]
    %v1881 = vld [vmem:[%s7 + $0x1d0] sm:$0xff]
    %v1882 = vld [vmem:[%s7 + $0x1d8] sm:$0xff]
    %v1883 = vld [vmem:[%s7 + $0x1e0] sm:$0xff]
    %v1884 = vld [vmem:[%s7 + $0x1e8] sm:$0xff]
    %v1885 = vld [vmem:[%s7 + $0x1f0] sm:$0xff]
    %v1886 = vld [vmem:[%s7 + $0x1f8] sm:$0xff]
    %v1887 = vld [vmem:[%s7 + $0x200] sm:$0xff]
    %v1888 = vld [vmem:[%s7 + $0x208] sm:$0xff]
    %v1889 = vld [vmem:[%s7 + $0x210] sm:$0xff]
    %v1890 = vld [vmem:[%s7 + $0x218] sm:$0xff]
    %v1891 = vld [vmem:[%s7 + $0x220] sm:$0xff]
    %v1892 = vld [vmem:[%s7 + $0x228] sm:$0xff]
    %v1893 = vld [vmem:[%s7 + $0x230] sm:$0xff]
    %v1894 = vld [vmem:[%s7 + $0x238] sm:$0xff]
    %v1895 = vld [vmem:[%s7 + $0x240] sm:$0xff]
    %v1896 = vld [vmem:[%s7 + $0x248] sm:$0xff]
    %v1897 = vld [vmem:[%s7 + $0x250] sm:$0xff]
    %v1898 = vld [vmem:[%s7 + $0x258] sm:$0xff]
    %v1899 = vld [vmem:[%s7 + $0x260] sm:$0xff]
    %v1900 = vld [vmem:[%s7 + $0x268] sm:$0xff]
    %v1901 = vld [vmem:[%s7 + $0x270] sm:$0xff]
    %v1902 = vld [vmem:[%s7 + $0x278] sm:$0xff]
    %v1903 = vld [vmem:[%s7 + $0x280] sm:$0xff]
    %v1904 = vld [vmem:[%s7 + $0x288] sm:$0xff]
    %v1905 = vld [vmem:[%s7 + $0x290] sm:$0xff]
    %v1906 = vld [vmem:[%s7 + $0x298] sm:$0xff]
    %v1907 = vld [vmem:[%s7 + $0x2a0] sm:$0xff]
    %v1908 = vld [vmem:[%s7 + $0x2a8] sm:$0xff]
    %v1909 = vld [vmem:[%s7 + $0x2b0] sm:$0xff]
    %v1910 = vld [vmem:[%s7 + $0x2b8] sm:$0xff]
    %v1911 = vld [vmem:[%s7 + $0x2c0] sm:$0xff]
    %v1912 = vld [vmem:[%s7 + $0x2c8] sm:$0xff]
    %v1913 = vld [vmem:[%s7 + $0x2d0] sm:$0xff]
    %v1914 = vld [vmem:[%s7 + $0x2d8] sm:$0xff]
    %v1915 = vld [vmem:[%s7 + $0x2e0] sm:$0xff]
    %v1916 = vld [vmem:[%s7 + $0x2e8] sm:$0xff]
    %v1917 = vld [vmem:[%s7 + $0x2f0] sm:$0xff]
    %v1918 = vld [vmem:[%s7 + $0x2f8] sm:$0xff]
    %v1919 = vld [vmem:[%s7 + $0x300] sm:$0xff]
    %v1920 = vld [vmem:[%s7 + $0x308] sm:$0xff]
    %v1921 = vld [vmem:[%s7 + $0x310] sm:$0xff]
    %v1922 = vld [vmem:[%s7 + $0x318] sm:$0xff]
    %v1923 = vld [vmem:[%s7 + $0x320] sm:$0xff]
    %v1924 = vld [vmem:[%s7 + $0x328] sm:$0xff]
    %v1925 = vld [vmem:[%s7 + $0x330] sm:$0xff]
    %v1926 = vld [vmem:[%s7 + $0x338] sm:$0xff]
    %v1927 = vld [vmem:[%s7 + $0x340] sm:$0xff]
    %v1928 = vld [vmem:[%s7 + $0x348] sm:$0xff]
    %v1929 = vld [vmem:[%s7 + $0x350] sm:$0xff]
    %v1930 = vld [vmem:[%s7 + $0x358] sm:$0xff]
    %v1931 = vld [vmem:[%s7 + $0x360] sm:$0xff]
    %v1932 = vld [vmem:[%s7 + $0x368] sm:$0xff]
    %v1933 = vld [vmem:[%s7 + $0x370] sm:$0xff]
    %v1934 = vld [vmem:[%s7 + $0x378] sm:$0xff]
    %v1935 = vld [vmem:[%s7 + $0x380] sm:$0xff]
    %v1936 = vld [vmem:[%s7 + $0x388] sm:$0xff]
    %v1937 = vld [vmem:[%s7 + $0x390] sm:$0xff]
    %v1938 = vld [vmem:[%s7 + $0x398] sm:$0xff]
    %v1939 = vld [vmem:[%s7 + $0x3a0] sm:$0xff]
    %v1940 = vld [vmem:[%s7 + $0x3a8] sm:$0xff]
    %v1941 = vld [vmem:[%s7 + $0x3b0] sm:$0xff]
    %v1942 = vld [vmem:[%s7 + $0x3b8] sm:$0xff]
    %v1943 = vld [vmem:[%s7 + $0x3c0] sm:$0xff]
    %v1944 = vld [vmem:[%s7 + $0x3c8] sm:$0xff]
    %v1945 = vld [vmem:[%s7 + $0x3d0] sm:$0xff]
    %v1946 = vld [vmem:[%s7 + $0x3d8] sm:$0xff]
    %v1947 = vld [vmem:[%s7 + $0x3e0] sm:$0xff]
    %v1948 = vld [vmem:[%s8] sm:$0xff]
    %v1949 = vld [vmem:[%s8 + $0x8] sm:$0xff]
    %v1950 = vld [vmem:[%s8 + $0x10] sm:$0xff]
    %v1951 = vld [vmem:[%s8 + $0x18] sm:$0xff]
    %v1952 = vld [vmem:[%s8 + $0x20] sm:$0xff]
    %v1953 = vld [vmem:[%s8 + $0x28] sm:$0xff]
    %v1954 = vld [vmem:[%s8 + $0x30] sm:$0xff]
    %v1955 = vld [vmem:[%s8 + $0x38] sm:$0xff]
    %v1956 = vld [vmem:[%s8 + $0x40] sm:$0xff]
    %v1957 = vld [vmem:[%s8 + $0x48] sm:$0xff]
    %v1958 = vld [vmem:[%s8 + $0x50] sm:$0xff]
    %v1959 = vld [vmem:[%s8 + $0x58] sm:$0xff]
    %v1960 = vld [vmem:[%s8 + $0x60] sm:$0xff]
    %v1961 = vld [vmem:[%s8 + $0x68] sm:$0xff]
    %v1962 = vld [vmem:[%s8 + $0x70] sm:$0xff]
    %v1963 = vld [vmem:[%s8 + $0x78] sm:$0xff]
    %v1964 = vld [vmem:[%s8 + $0x80] sm:$0xff]
    %v1965 = vld [vmem:[%s8 + $0x88] sm:$0xff]
    %v1966 = vld [vmem:[%s8 + $0x90] sm:$0xff]
    %v1967 = vld [vmem:[%s8 + $0x98] sm:$0xff]
    %v1968 = vld [vmem:[%s8 + $0xa0] sm:$0xff]
    %v1969 = vld [vmem:[%s8 + $0xa8] sm:$0xff]
    %v1970 = vld [vmem:[%s8 + $0xb0] sm:$0xff]
    %v1971 = vld [vmem:[%s8 + $0xb8] sm:$0xff]
    %v1972 = vld [vmem:[%s8 + $0xc0] sm:$0xff]
    %v1973 = vld [vmem:[%s8 + $0xc8] sm:$0xff]
    %v1974 = vld [vmem:[%s8 + $0xd0] sm:$0xff]
    %v1975 = vld [vmem:[%s8 + $0xd8] sm:$0xff]
    %v1976 = vld [vmem:[%s8 + $0xe0] sm:$0xff]
    %v1977 = vld [vmem:[%s8 + $0xe8] sm:$0xff]
    %v1978 = vld [vmem:[%s8 + $0xf0] sm:$0xff]
    %v1979 = vld [vmem:[%s8 + $0xf8] sm:$0xff]
    %v1980 = vld [vmem:[%s8 + $0x100] sm:$0xff]
    %v1981 = vld [vmem:[%s8 + $0x108] sm:$0xff]
    %v1982 = vld [vmem:[%s8 + $0x110] sm:$0xff]
    %v1983 = vld [vmem:[%s8 + $0x118] sm:$0xff]
    %v1984 = vld [vmem:[%s8 + $0x120] sm:$0xff]
    %v1985 = vld [vmem:[%s8 + $0x128] sm:$0xff]
    %v1986 = vld [vmem:[%s8 + $0x130] sm:$0xff]
    %v1987 = vld [vmem:[%s8 + $0x138] sm:$0xff]
    %v1988 = vld [vmem:[%s8 + $0x140] sm:$0xff]
    %v1989 = vld [vmem:[%s8 + $0x148] sm:$0xff]
    %v1990 = vld [vmem:[%s8 + $0x150] sm:$0xff]
    %v1991 = vld [vmem:[%s8 + $0x158] sm:$0xff]
    %v1992 = vld [vmem:[%s8 + $0x160] sm:$0xff]
    %v1993 = vld [vmem:[%s8 + $0x168] sm:$0xff]
    %v1994 = vld [vmem:[%s8 + $0x170] sm:$0xff]
    %v1995 = vld [vmem:[%s8 + $0x178] sm:$0xff]
    %v1996 = vld [vmem:[%s8 + $0x180] sm:$0xff]
    %v1997 = vld [vmem:[%s8 + $0x188] sm:$0xff]
    %v1998 = vld [vmem:[%s8 + $0x190] sm:$0xff]
    %v1999 = vld [vmem:[%s8 + $0x198] sm:$0xff]
    %v2000 = vld [vmem:[%s8 + $0x1a0] sm:$0xff]
    %v2001 = vld [vmem:[%s8 + $0x1a8] sm:$0xff]
    %v2002 = vld [vmem:[%s8 + $0x1b0] sm:$0xff]
    %v2003 = vld [vmem:[%s8 + $0x1b8] sm:$0xff]
    %v2004 = vld [vmem:[%s8 + $0x1c0] sm:$0xff]
    %v2005 = vld [vmem:[%s8 + $0x1c8] sm:$0xff]
    %v2006 = vld [vmem:[%s8 + $0x1d0] sm:$0xff]
    %v2007 = vld [vmem:[%s8 + $0x1d8] sm:$0xff]
    %v2008 = vld [vmem:[%s8 + $0x1e0] sm:$0xff]
    %v2009 = vld [vmem:[%s8 + $0x1e8] sm:$0xff]
    %v2010 = vld [vmem:[%s8 + $0x1f0] sm:$0xff]
    %v2011 = vld [vmem:[%s8 + $0x1f8] sm:$0xff]
    %v2012 = vld [vmem:[%s8 + $0x200] sm:$0xff]
    %v2013 = vld [vmem:[%s8 + $0x208] sm:$0xff]
    %v2014 = vld [vmem:[%s8 + $0x210] sm:$0xff]
    %v2015 = vld [vmem:[%s8 + $0x218] sm:$0xff]
    %v2016 = vld [vmem:[%s8 + $0x220] sm:$0xff]
    %v2017 = vld [vmem:[%s8 + $0x228] sm:$0xff]
    %v2018 = vld [vmem:[%s8 + $0x230] sm:$0xff]
    %v2019 = vld [vmem:[%s8 + $0x238] sm:$0xff]
    %v2020 = vld [vmem:[%s8 + $0x240] sm:$0xff]
    %v2021 = vld [vmem:[%s8 + $0x248] sm:$0xff]
    %v2022 = vld [vmem:[%s8 + $0x250] sm:$0xff]
    %v2023 = vld [vmem:[%s8 + $0x258] sm:$0xff]
    %v2024 = vld [vmem:[%s8 + $0x260] sm:$0xff]
    %v2025 = vld [vmem:[%s8 + $0x268] sm:$0xff]
    %v2026 = vld [vmem:[%s8 + $0x270] sm:$0xff]
    %v2027 = vld [vmem:[%s8 + $0x278] sm:$0xff]
    %v2028 = vld [vmem:[%s8 + $0x280] sm:$0xff]
    %v2029 = vld [vmem:[%s8 + $0x288] sm:$0xff]
    %v2030 = vld [vmem:[%s8 + $0x290] sm:$0xff]
    %v2031 = vld [vmem:[%s8 + $0x298] sm:$0xff]
    %v2032 = vld [vmem:[%s8 + $0x2a0] sm:$0xff]
    %v2033 = vld [vmem:[%s8 + $0x2a8] sm:$0xff]
    %v2034 = vld [vmem:[%s8 + $0x2b0] sm:$0xff]
    %v2035 = vld [vmem:[%s8 + $0x2b8] sm:$0xff]
    %v2036 = vld [vmem:[%s8 + $0x2c0] sm:$0xff]
    %v2037 = vld [vmem:[%s8 + $0x2c8] sm:$0xff]
    %v2038 = vld [vmem:[%s8 + $0x2d0] sm:$0xff]
    %v2039 = vld [vmem:[%s8 + $0x2d8] sm:$0xff]
    %v2040 = vld [vmem:[%s8 + $0x2e0] sm:$0xff]
    %v2041 = vld [vmem:[%s8 + $0x2e8] sm:$0xff]
    %v2042 = vld [vmem:[%s8 + $0x2f0] sm:$0xff]
    %v2043 = vld [vmem:[%s8 + $0x2f8] sm:$0xff]
    %v2044 = vld [vmem:[%s8 + $0x300] sm:$0xff]
    %v2045 = vld [vmem:[%s8 + $0x308] sm:$0xff]
    %v2046 = vld [vmem:[%s8 + $0x310] sm:$0xff]
    %v2047 = vld [vmem:[%s8 + $0x318] sm:$0xff]
    %v2048 = vld [vmem:[%s8 + $0x320] sm:$0xff]
    %v2049 = vld [vmem:[%s8 + $0x328] sm:$0xff]
    %v2050 = vld [vmem:[%s8 + $0x330] sm:$0xff]
    %v2051 = vld [vmem:[%s8 + $0x338] sm:$0xff]
    %v2052 = vld [vmem:[%s8 + $0x340] sm:$0xff]
    %v2053 = vld [vmem:[%s8 + $0x348] sm:$0xff]
    %v2054 = vld [vmem:[%s8 + $0x350] sm:$0xff]
    %v2055 = vld [vmem:[%s8 + $0x358] sm:$0xff]
    %v2056 = vld [vmem:[%s8 + $0x360] sm:$0xff]
    %v2057 = vld [vmem:[%s8 + $0x368] sm:$0xff]
    %v2058 = vld [vmem:[%s8 + $0x370] sm:$0xff]
    %v2059 = vld [vmem:[%s8 + $0x378] sm:$0xff]
    %v2060 = vld [vmem:[%s8 + $0x380] sm:$0xff]
    %v2061 = vld [vmem:[%s8 + $0x388] sm:$0xff]
    %v2062 = vld [vmem:[%s8 + $0x390] sm:$0xff]
    %v2063 = vld [vmem:[%s8 + $0x398] sm:$0xff]
    %v2064 = vld [vmem:[%s8 + $0x3a0] sm:$0xff]
    %v2065 = vld [vmem:[%s8 + $0x3a8] sm:$0xff]
    %v2066 = vld [vmem:[%s8 + $0x3b0] sm:$0xff]
    %v2067 = vld [vmem:[%s8 + $0x3b8] sm:$0xff]
    %v2068 = vld [vmem:[%s8 + $0x3c0] sm:$0xff]
    %v2069 = vld [vmem:[%s8 + $0x3c8] sm:$0xff]
    %v2070 = vld [vmem:[%s8 + $0x3d0] sm:$0xff]
    %v2071 = vld [vmem:[%s8 + $0x3d8] sm:$0xff]
    %v2072 = vld [vmem:[%s8 + $0x3e0] sm:$0xff]
    %vm2073 = vcmask 850944
    %v2075 = vsel %vm2073, %v1820, 0
    %2077 = vmatprep.subr.mxu0 0.0
    %2078 = vmatpush1.msra.mxu0 %v1948
    %2079 = vmatprep.subr.mxu0 0.0
    %2080 = vmatpush1.msra.mxu0 %v1949
    %2081 = vmatprep.subr.mxu0 0.0
    %2082 = vmatpush1.msra.mxu0 %v1950
    %2083 = vmatprep.subr.mxu0 0.0
    %2084 = vmatpush1.msra.mxu0 %v1951
    %2085 = vmatprep.subr.mxu0 0.0
    %2086 = vmatpush1.msra.mxu0 %v1952
    %2087 = vmatprep.subr.mxu0 0.0
    %2088 = vmatpush1.msra.mxu0 %v1953
    %2089 = vmatprep.subr.mxu0 0.0
    %2090 = vmatpush1.msra.mxu0 %v1954
    %2091 = vmatprep.subr.mxu0 0.0
    %2092 = vmatpush1.msra.mxu0 %v1955
    %2093 = vmatprep.subr.mxu0 0.0
    %2094 = vmatpush1.msra.mxu0 %v1956
    %2095 = vmatprep.subr.mxu0 0.0
    %2096 = vmatpush1.msra.mxu0 %v1957
    %2097 = vmatprep.subr.mxu0 0.0
    %2098 = vmatpush1.msra.mxu0 %v1958
    %2099 = vmatprep.subr.mxu0 0.0
    %2100 = vmatpush1.msra.mxu0 %v1959
    %2101 = vmatprep.subr.mxu0 0.0
    %2102 = vmatpush1.msra.mxu0 %v1960
    %2103 = vmatprep.subr.mxu0 0.0
    %2104 = vmatpush1.msra.mxu0 %v1961
    %2105 = vmatprep.subr.mxu0 0.0
    %2106 = vmatpush1.msra.mxu0 %v1962
    %2107 = vmatprep.subr.mxu0 0.0
    %2108 = vmatpush1.msra.mxu0 %v1963
    %2109 = vmatprep.subr.mxu0 0.0
    %2110 = vmatpush1.msra.mxu0 %v1964
    %2111 = vmatprep.subr.mxu0 0.0
    %2112 = vmatpush1.msra.mxu0 %v1965
    %2113 = vmatprep.subr.mxu0 0.0
    %2114 = vmatpush1.msra.mxu0 %v1966
    %2115 = vmatprep.subr.mxu0 0.0
    %2116 = vmatpush1.msra.mxu0 %v1967
    %2117 = vmatprep.subr.mxu0 0.0
    %2118 = vmatpush1.msra.mxu0 %v1968
    %2119 = vmatprep.subr.mxu0 0.0
    %2120 = vmatpush1.msra.mxu0 %v1969
    %2121 = vmatprep.subr.mxu0 0.0
    %2122 = vmatpush1.msra.mxu0 %v1970
    %2123 = vmatprep.subr.mxu0 0.0
    %2124 = vmatpush1.msra.mxu0 %v1971
    %2125 = vmatprep.subr.mxu0 0.0
    %2126 = vmatpush1.msra.mxu0 %v1972
    %2127 = vmatprep.subr.mxu0 0.0
    %2128 = vmatpush1.msra.mxu0 %v1973
    %2129 = vmatprep.subr.mxu0 0.0
    %2130 = vmatpush1.msra.mxu0 %v1974
    %2131 = vmatprep.subr.mxu0 0.0
    %2132 = vmatpush1.msra.mxu0 %v1975
    %2133 = vmatprep.subr.mxu0 0.0
    %2134 = vmatpush1.msra.mxu0 %v1976
    %2135 = vmatprep.subr.mxu0 0.0
    %2136 = vmatpush1.msra.mxu0 %v1977
    %2137 = vmatprep.subr.mxu0 0.0
    %2138 = vmatpush1.msra.mxu0 %v1978
    %2139 = vmatprep.subr.mxu0 0.0
    %2140 = vmatpush1.msra.mxu0 %v1979
    %2141 = vmatprep.mubr.f32.mxu0 %v1814
    %2142 = vmatmul.mubr.f32.gmra.mrb[0].mxu0 %v1813
    %v2143 = vpop.f32.mrb[0].mxu0
    %v2144 = vadd.f32 0.0, %v2143
    %v2145 = vpop.f32.mrb[0].mxu0
    %2146 = vdwg.mxu0
    %2147 = vmatprep.subr.mxu0 0.0
    %2148 = vmatpush1.msra.mxu0 %v1980
    %2149 = vmatprep.subr.mxu0 0.0
    %2150 = vmatpush1.msra.mxu0 %v1981
    %2151 = vmatprep.subr.mxu0 0.0
    %2152 = vmatpush1.msra.mxu0 %v1982
    %2153 = vmatprep.subr.mxu0 0.0
    %2154 = vmatpush1.msra.mxu0 %v1983
    %2155 = vmatprep.subr.mxu0 0.0
    %2156 = vmatpush1.msra.mxu0 %v1984
    %2157 = vmatprep.subr.mxu0 0.0
    %2158 = vmatpush1.msra.mxu0 %v1985
    %2159 = vmatprep.subr.mxu0 0.0
    %2160 = vmatpush1.msra.mxu0 %v1986
    %2161 = vmatprep.subr.mxu0 0.0
    %2162 = vmatpush1.msra.mxu0 %v1987
    %2163 = vmatprep.subr.mxu0 0.0
    %2164 = vmatpush1.msra.mxu0 %v1988
    %2165 = vmatprep.subr.mxu0 0.0
    %2166 = vmatpush1.msra.mxu0 %v1989
    %2167 = vmatprep.subr.mxu0 0.0
    %2168 = vmatpush1.msra.mxu0 %v1990
    %2169 = vmatprep.subr.mxu0 0.0
    %2170 = vmatpush1.msra.mxu0 %v1991
    %2171 = vmatprep.subr.mxu0 0.0
    %2172 = vmatpush1.msra.mxu0 %v1992
    %2173 = vmatprep.subr.mxu0 0.0
    %2174 = vmatpush1.msra.mxu0 %v1993
    %2175 = vmatprep.subr.mxu0 0.0
    %2176 = vmatpush1.msra.mxu0 %v1994
    %2177 = vmatprep.subr.mxu0 0.0
    %2178 = vmatpush1.msra.mxu0 %v1995
    %2179 = vmatprep.subr.mxu0 0.0
    %2180 = vmatpush1.msra.mxu0 %v1996
    %2181 = vmatprep.subr.mxu0 0.0
    %2182 = vmatpush1.msra.mxu0 %v1997
    %2183 = vmatprep.subr.mxu0 0.0
    %2184 = vmatpush1.msra.mxu0 %v1998
    %2185 = vmatprep.subr.mxu0 0.0
    %2186 = vmatpush1.msra.mxu0 %v1999
    %2187 = vmatprep.subr.mxu0 0.0
    %2188 = vmatpush1.msra.mxu0 %v2000
    %2189 = vmatprep.subr.mxu0 0.0
    %2190 = vmatpush1.msra.mxu0 %v2001
    %2191 = vmatprep.subr.mxu0 0.0
    %2192 = vmatpush1.msra.mxu0 %v2002
    %2193 = vmatprep.subr.mxu0 0.0
    %2194 = vmatpush1.msra.mxu0 %v2003
    %2195 = vmatprep.subr.mxu0 0.0
    %2196 = vmatpush1.msra.mxu0 %v2004
    %2197 = vmatprep.subr.mxu0 0.0
    %2198 = vmatpush1.msra.mxu0 %v2005
    %2199 = vmatprep.subr.mxu0 0.0
    %2200 = vmatpush1.msra.mxu0 %v2006
    %2201 = vmatprep.subr.mxu0 0.0
    %2202 = vmatpush1.msra.mxu0 %v2007
    %2203 = vmatprep.subr.mxu0 0.0
    %2204 = vmatpush1.msra.mxu0 %v2008
    %2205 = vmatprep.subr.mxu0 0.0
    %2206 = vmatpush1.msra.mxu0 %v2009
    %2207 = vmatprep.subr.mxu0 0.0
    %2208 = vmatpush1.msra.mxu0 %v2010
    %2209 = vmatprep.subr.mxu0 0.0
    %2210 = vmatpush1.msra.mxu0 %v2011
    %2211 = vmatprep.mubr.f32.mxu0 %v1816
    %2212 = vmatmul.mubr.f32.gmra.mrb[0].mxu0 %v1815
    %v2213 = vpop.f32.mrb[0].mxu0
    %v2214 = vadd.f32 %v2144, %v2213
    %v2215 = vpop.f32.mrb[0].mxu0
    %2216 = vdwg.mxu0
    %2217 = vmatprep.subr.mxu0 0.0
    %2218 = vmatpush1.msra.mxu0 %v2012
    %2219 = vmatprep.subr.mxu0 0.0
    %2220 = vmatpush1.msra.mxu0 %v2013
    %2221 = vmatprep.subr.mxu0 0.0
    %2222 = vmatpush1.msra.mxu0 %v2014
    %2223 = vmatprep.subr.mxu0 0.0
    %2224 = vmatpush1.msra.mxu0 %v2015
    %2225 = vmatprep.subr.mxu0 0.0
    %2226 = vmatpush1.msra.mxu0 %v2016
    %2227 = vmatprep.subr.mxu0 0.0
    %2228 = vmatpush1.msra.mxu0 %v2017
    %2229 = vmatprep.subr.mxu0 0.0
    %2230 = vmatpush1.msra.mxu0 %v2018
    %2231 = vmatprep.subr.mxu0 0.0
    %2232 = vmatpush1.msra.mxu0 %v2019
    %2233 = vmatprep.subr.mxu0 0.0
    %2234 = vmatpush1.msra.mxu0 %v2020
    %2235 = vmatprep.subr.mxu0 0.0
    %2236 = vmatpush1.msra.mxu0 %v2021
    %2237 = vmatprep.subr.mxu0 0.0
    %2238 = vmatpush1.msra.mxu0 %v2022
    %2239 = vmatprep.subr.mxu0 0.0
    %2240 = vmatpush1.msra.mxu0 %v2023
    %2241 = vmatprep.subr.mxu0 0.0
    %2242 = vmatpush1.msra.mxu0 %v2024
    %2243 = vmatprep.subr.mxu0 0.0
    %2244 = vmatpush1.msra.mxu0 %v2025
    %2245 = vmatprep.subr.mxu0 0.0
    %2246 = vmatpush1.msra.mxu0 %v2026
    %2247 = vmatprep.subr.mxu0 0.0
    %2248 = vmatpush1.msra.mxu0 %v2027
    %2249 = vmatprep.subr.mxu0 0.0
    %2250 = vmatpush1.msra.mxu0 %v2028
    %2251 = vmatprep.subr.mxu0 0.0
    %2252 = vmatpush1.msra.mxu0 %v2029
    %2253 = vmatprep.subr.mxu0 0.0
    %2254 = vmatpush1.msra.mxu0 %v2030
    %2255 = vmatprep.subr.mxu0 0.0
    %2256 = vmatpush1.msra.mxu0 %v2031
    %2257 = vmatprep.subr.mxu0 0.0
    %2258 = vmatpush1.msra.mxu0 %v2032
    %2259 = vmatprep.subr.mxu0 0.0
    %2260 = vmatpush1.msra.mxu0 %v2033
    %2261 = vmatprep.subr.mxu0 0.0
    %2262 = vmatpush1.msra.mxu0 %v2034
    %2263 = vmatprep.subr.mxu0 0.0
    %2264 = vmatpush1.msra.mxu0 %v2035
    %2265 = vmatprep.subr.mxu0 0.0
    %2266 = vmatpush1.msra.mxu0 %v2036
    %2267 = vmatprep.subr.mxu0 0.0
    %2268 = vmatpush1.msra.mxu0 %v2037
    %2269 = vmatprep.subr.mxu0 0.0
    %2270 = vmatpush1.msra.mxu0 %v2038
    %2271 = vmatprep.subr.mxu0 0.0
    %2272 = vmatpush1.msra.mxu0 %v2039
    %2273 = vmatprep.subr.mxu0 0.0
    %2274 = vmatpush1.msra.mxu0 %v2040
    %2275 = vmatprep.subr.mxu0 0.0
    %2276 = vmatpush1.msra.mxu0 %v2041
    %2277 = vmatprep.subr.mxu0 0.0
    %2278 = vmatpush1.msra.mxu0 %v2042
    %2279 = vmatprep.subr.mxu0 0.0
    %2280 = vmatpush1.msra.mxu0 %v2043
    %2281 = vmatprep.mubr.f32.mxu0 %v1818
    %2282 = vmatmul.mubr.f32.gmra.mrb[0].mxu0 %v1817
    %v2283 = vpop.f32.mrb[0].mxu0
    %v2284 = vadd.f32 %v2214, %v2283
    %v2285 = vpop.f32.mrb[0].mxu0
    %2286 = vdwg.mxu0
    %2287 = vmatprep.subr.mxu0 0.0
    %2288 = vmatpush1.msra.mxu0 %v2044
    %2289 = vmatprep.subr.mxu0 0.0
    %2290 = vmatpush1.msra.mxu0 %v2045
    %2291 = vmatprep.subr.mxu0 0.0
    %2292 = vmatpush1.msra.mxu0 %v2046
    %2293 = vmatprep.subr.mxu0 0.0
    %2294 = vmatpush1.msra.mxu0 %v2047
    %2295 = vmatprep.subr.mxu0 0.0
    %2296 = vmatpush1.msra.mxu0 %v2048
    %2297 = vmatprep.subr.mxu0 0.0
    %2298 = vmatpush1.msra.mxu0 %v2049
    %2299 = vmatprep.subr.mxu0 0.0
    %2300 = vmatpush1.msra.mxu0 %v2050
    %2301 = vmatprep.subr.mxu0 0.0
    %2302 = vmatpush1.msra.mxu0 %v2051
    %2303 = vmatprep.subr.mxu0 0.0
    %2304 = vmatpush1.msra.mxu0 %v2052
    %2305 = vmatprep.subr.mxu0 0.0
    %2306 = vmatpush1.msra.mxu0 %v2053
    %2307 = vmatprep.subr.mxu0 0.0
    %2308 = vmatpush1.msra.mxu0 %v2054
    %2309 = vmatprep.subr.mxu0 0.0
    %2310 = vmatpush1.msra.mxu0 %v2055
    %2311 = vmatprep.subr.mxu0 0.0
    %2312 = vmatpush1.msra.mxu0 %v2056
    %2313 = vmatprep.subr.mxu0 0.0
    %2314 = vmatpush1.msra.mxu0 %v2057
    %2315 = vmatprep.subr.mxu0 0.0
    %2316 = vmatpush1.msra.mxu0 %v2058
    %2317 = vmatprep.subr.mxu0 0.0
    %2318 = vmatpush1.msra.mxu0 %v2059
    %2319 = vmatprep.subr.mxu0 0.0
    %2320 = vmatpush1.msra.mxu0 %v2060
    %2321 = vmatprep.subr.mxu0 0.0
    %2322 = vmatpush1.msra.mxu0 %v2061
    %2323 = vmatprep.subr.mxu0 0.0
    %2324 = vmatpush1.msra.mxu0 %v2062
    %2325 = vmatprep.subr.mxu0 0.0
    %2326 = vmatpush1.msra.mxu0 %v2063
    %2327 = vmatprep.subr.mxu0 0.0
    %2328 = vmatpush1.msra.mxu0 %v2064
    %2329 = vmatprep.subr.mxu0 0.0
    %2330 = vmatpush1.msra.mxu0 %v2065
    %2331 = vmatprep.subr.mxu0 0.0
    %2332 = vmatpush1.msra.mxu0 %v2066
    %2333 = vmatprep.subr.mxu0 0.0
    %2334 = vmatpush1.msra.mxu0 %v2067
    %2335 = vmatprep.subr.mxu0 0.0
    %2336 = vmatpush1.msra.mxu0 %v2068
    %2337 = vmatprep.subr.mxu0 0.0
    %2338 = vmatpush1.msra.mxu0 %v2069
    %2339 = vmatprep.subr.mxu0 0.0
    %2340 = vmatpush1.msra.mxu0 %v2070
    %2341 = vmatprep.subr.mxu0 0.0
    %2342 = vmatpush1.msra.mxu0 %v2071
    %2343 = vmatprep.subr.mxu0 0.0
    %2344 = vmatpush1.msra.mxu0 %v2072
    %2345 = vmatprep.subr.mxu0 0.0
    %2346 = vmatpush1.msra.mxu0 0.0
    %2347 = vmatprep.subr.mxu0 0.0
    %2348 = vmatpush1.msra.mxu0 0.0
    %2349 = vmatprep.subr.mxu0 0.0
    %2350 = vmatpush1.msra.mxu0 0.0
    %2351 = vmatprep.mubr.f32.mxu0 %v2075
    %2352 = vmatmul.mubr.f32.gmra.mrb[0].mxu0 %v1819
    %v2353 = vpop.f32.mrb[0].mxu0
    %v2354 = vadd.f32 %v2284, %v2353
    %v2355 = vpop.f32.mrb[0].mxu0
    %2356 = vdwg.mxu0
    %v2359 = vcombine.high %v1821, %v1821
    %v2361 = vunpack.c.l.s4 1983009808
    %v2362 = vunpack.c.0.s8 %v2361
    %v2363 = vlaneseq
    %v2364 = vshrl.u32 %v2363, 7
    %v2365 = vsub.s32 %v2362, %v2364
    %v2366 = vrot.slane %v1821, %v2365
    %v2368 = vunpack.c.l.s4 1983009808
    %v2369 = vunpack.c.0.s8 %v2368
    %v2370 = vlaneseq
    %v2371 = vshrl.u32 %v2370, 7
    %v2372 = vsub.s32 %v2369, %v2371
    %v2373 = vrot.slane %v2359, %v2372
    %v2374 = vcombine.high %v2366, %v2366
    %v2375 = vcombine.high %v2373, %v2373
    %v2376 = vcombine.high %v1822, %v1822
    %v2378 = vunpack.c.l.s4 1983009808
    %v2379 = vunpack.c.0.s8 %v2378
    %v2380 = vlaneseq
    %v2381 = vshrl.u32 %v2380, 7
    %v2382 = vsub.s32 %v2379, %v2381
    %v2383 = vrot.slane %v1822, %v2382
    %v2385 = vunpack.c.l.s4 1983009808
    %v2386 = vunpack.c.0.s8 %v2385
    %v2387 = vlaneseq
    %v2388 = vshrl.u32 %v2387, 7
    %v2389 = vsub.s32 %v2386, %v2388
    %v2390 = vrot.slane %v2376, %v2389
    %v2391 = vcombine.high %v2383, %v2383
    %v2392 = vcombine.high %v2390, %v2390
    %v2400 = vsel %vm2073, %v2392, 0
    %2402 = vmatprep.subr.mxu0 0.0
    %2403 = vmatpush1.msra.mxu0 %v1823
    %2404 = vmatprep.subr.mxu0 0.0
    %2405 = vmatpush1.msra.mxu0 %v1824
    %2406 = vmatprep.subr.mxu0 0.0
    %2407 = vmatpush1.msra.mxu0 %v1825
    %2408 = vmatprep.subr.mxu0 0.0
    %2409 = vmatpush1.msra.mxu0 %v1826
    %2410 = vmatprep.subr.mxu0 0.0
    %2411 = vmatpush1.msra.mxu0 %v1827
    %2412 = vmatprep.subr.mxu0 0.0
    %2413 = vmatpush1.msra.mxu0 %v1828
    %2414 = vmatprep.subr.mxu0 0.0
    %2415 = vmatpush1.msra.mxu0 %v1829
    %2416 = vmatprep.subr.mxu0 0.0
    %2417 = vmatpush1.msra.mxu0 %v1830
    %2418 = vmatprep.subr.mxu0 0.0
    %2419 = vmatpush1.msra.mxu0 %v1831
    %2420 = vmatprep.subr.mxu0 0.0
    %2421 = vmatpush1.msra.mxu0 %v1832
    %2422 = vmatprep.subr.mxu0 0.0
    %2423 = vmatpush1.msra.mxu0 %v1833
    %2424 = vmatprep.subr.mxu0 0.0
    %2425 = vmatpush1.msra.mxu0 %v1834
    %2426 = vmatprep.subr.mxu0 0.0
    %2427 = vmatpush1.msra.mxu0 %v1835
    %2428 = vmatprep.subr.mxu0 0.0
    %2429 = vmatpush1.msra.mxu0 %v1836
    %2430 = vmatprep.subr.mxu0 0.0
    %2431 = vmatpush1.msra.mxu0 %v1837
    %2432 = vmatprep.subr.mxu0 0.0
    %2433 = vmatpush1.msra.mxu0 %v1838
    %2434 = vmatprep.subr.mxu0 0.0
    %2435 = vmatpush1.msra.mxu0 %v1839
    %2436 = vmatprep.subr.mxu0 0.0
    %2437 = vmatpush1.msra.mxu0 %v1840
    %2438 = vmatprep.subr.mxu0 0.0
    %2439 = vmatpush1.msra.mxu0 %v1841
    %2440 = vmatprep.subr.mxu0 0.0
    %2441 = vmatpush1.msra.mxu0 %v1842
    %2442 = vmatprep.subr.mxu0 0.0
    %2443 = vmatpush1.msra.mxu0 %v1843
    %2444 = vmatprep.subr.mxu0 0.0
    %2445 = vmatpush1.msra.mxu0 %v1844
    %2446 = vmatprep.subr.mxu0 0.0
    %2447 = vmatpush1.msra.mxu0 %v1845
    %2448 = vmatprep.subr.mxu0 0.0
    %2449 = vmatpush1.msra.mxu0 %v1846
    %2450 = vmatprep.subr.mxu0 0.0
    %2451 = vmatpush1.msra.mxu0 %v1847
    %2452 = vmatprep.subr.mxu0 0.0
    %2453 = vmatpush1.msra.mxu0 %v1848
    %2454 = vmatprep.subr.mxu0 0.0
    %2455 = vmatpush1.msra.mxu0 %v1849
    %2456 = vmatprep.subr.mxu0 0.0
    %2457 = vmatpush1.msra.mxu0 %v1850
    %2458 = vmatprep.subr.mxu0 0.0
    %2459 = vmatpush1.msra.mxu0 %v1851
    %2460 = vmatprep.subr.mxu0 0.0
    %2461 = vmatpush1.msra.mxu0 %v1852
    %2462 = vmatprep.subr.mxu0 0.0
    %2463 = vmatpush1.msra.mxu0 %v1853
    %2464 = vmatprep.subr.mxu0 0.0
    %2465 = vmatpush1.msra.mxu0 %v1854
    %2466 = vmatprep.mubr.f32.mxu0 %v2374
    %2467 = vmatmul.mubr.f32.gmra.mrb[0].mxu0 %v2366
    %v2468 = vpop.f32.mrb[0].mxu0
    %v2469 = vadd.f32 %v2354, %v2468
    %v2470 = vpop.f32.mrb[0].mxu0
    %2471 = vdwg.mxu0
    %2472 = vmatprep.subr.mxu0 0.0
    %2473 = vmatpush1.msra.mxu0 %v1855
    %2474 = vmatprep.subr.mxu0 0.0
    %2475 = vmatpush1.msra.mxu0 %v1856
    %2476 = vmatprep.subr.mxu0 0.0
    %2477 = vmatpush1.msra.mxu0 %v1857
    %2478 = vmatprep.subr.mxu0 0.0
    %2479 = vmatpush1.msra.mxu0 %v1858
    %2480 = vmatprep.subr.mxu0 0.0
    %2481 = vmatpush1.msra.mxu0 %v1859
    %2482 = vmatprep.subr.mxu0 0.0
    %2483 = vmatpush1.msra.mxu0 %v1860
    %2484 = vmatprep.subr.mxu0 0.0
    %2485 = vmatpush1.msra.mxu0 %v1861
    %2486 = vmatprep.subr.mxu0 0.0
    %2487 = vmatpush1.msra.mxu0 %v1862
    %2488 = vmatprep.subr.mxu0 0.0
    %2489 = vmatpush1.msra.mxu0 %v1863
    %2490 = vmatprep.subr.mxu0 0.0
    %2491 = vmatpush1.msra.mxu0 %v1864
    %2492 = vmatprep.subr.mxu0 0.0
    %2493 = vmatpush1.msra.mxu0 %v1865
    %2494 = vmatprep.subr.mxu0 0.0
    %2495 = vmatpush1.msra.mxu0 %v1866
    %2496 = vmatprep.subr.mxu0 0.0
    %2497 = vmatpush1.msra.mxu0 %v1867
    %2498 = vmatprep.subr.mxu0 0.0
    %2499 = vmatpush1.msra.mxu0 %v1868
    %2500 = vmatprep.subr.mxu0 0.0
    %2501 = vmatpush1.msra.mxu0 %v1869
    %2502 = vmatprep.subr.mxu0 0.0
    %2503 = vmatpush1.msra.mxu0 %v1870
    %2504 = vmatprep.subr.mxu0 0.0
    %2505 = vmatpush1.msra.mxu0 %v1871
    %2506 = vmatprep.subr.mxu0 0.0
    %2507 = vmatpush1.msra.mxu0 %v1872
    %2508 = vmatprep.subr.mxu0 0.0
    %2509 = vmatpush1.msra.mxu0 %v1873
    %2510 = vmatprep.subr.mxu0 0.0
    %2511 = vmatpush1.msra.mxu0 %v1874
    %2512 = vmatprep.subr.mxu0 0.0
    %2513 = vmatpush1.msra.mxu0 %v1875
    %2514 = vmatprep.subr.mxu0 0.0
    %2515 = vmatpush1.msra.mxu0 %v1876
    %2516 = vmatprep.subr.mxu0 0.0
    %2517 = vmatpush1.msra.mxu0 %v1877
    %2518 = vmatprep.subr.mxu0 0.0
    %2519 = vmatpush1.msra.mxu0 %v1878
    %2520 = vmatprep.subr.mxu0 0.0
    %2521 = vmatpush1.msra.mxu0 %v1879
    %2522 = vmatprep.subr.mxu0 0.0
    %2523 = vmatpush1.msra.mxu0 %v1880
    %2524 = vmatprep.subr.mxu0 0.0
    %2525 = vmatpush1.msra.mxu0 %v1881
    %2526 = vmatprep.subr.mxu0 0.0
    %2527 = vmatpush1.msra.mxu0 %v1882
    %2528 = vmatprep.subr.mxu0 0.0
    %2529 = vmatpush1.msra.mxu0 %v1883
    %2530 = vmatprep.subr.mxu0 0.0
    %2531 = vmatpush1.msra.mxu0 %v1884
    %2532 = vmatprep.subr.mxu0 0.0
    %2533 = vmatpush1.msra.mxu0 %v1885
    %2534 = vmatprep.subr.mxu0 0.0
    %2535 = vmatpush1.msra.mxu0 %v1886
    %2536 = vmatprep.mubr.f32.mxu0 %v2375
    %2537 = vmatmul.mubr.f32.gmra.mrb[0].mxu0 %v2373
    %v2538 = vpop.f32.mrb[0].mxu0
    %v2539 = vadd.f32 %v2469, %v2538
    %v2540 = vpop.f32.mrb[0].mxu0
    %2541 = vdwg.mxu0
    %2542 = vmatprep.subr.mxu0 0.0
    %2543 = vmatpush1.msra.mxu0 %v1887
    %2544 = vmatprep.subr.mxu0 0.0
    %2545 = vmatpush1.msra.mxu0 %v1888
    %2546 = vmatprep.subr.mxu0 0.0
    %2547 = vmatpush1.msra.mxu0 %v1889
    %2548 = vmatprep.subr.mxu0 0.0
    %2549 = vmatpush1.msra.mxu0 %v1890
    %2550 = vmatprep.subr.mxu0 0.0
    %2551 = vmatpush1.msra.mxu0 %v1891
    %2552 = vmatprep.subr.mxu0 0.0
    %2553 = vmatpush1.msra.mxu0 %v1892
    %2554 = vmatprep.subr.mxu0 0.0
    %2555 = vmatpush1.msra.mxu0 %v1893
    %2556 = vmatprep.subr.mxu0 0.0
    %2557 = vmatpush1.msra.mxu0 %v1894
    %2558 = vmatprep.subr.mxu0 0.0
    %2559 = vmatpush1.msra.mxu0 %v1895
    %2560 = vmatprep.subr.mxu0 0.0
    %2561 = vmatpush1.msra.mxu0 %v1896
    %2562 = vmatprep.subr.mxu0 0.0
    %2563 = vmatpush1.msra.mxu0 %v1897
    %2564 = vmatprep.subr.mxu0 0.0
    %2565 = vmatpush1.msra.mxu0 %v1898
    %2566 = vmatprep.subr.mxu0 0.0
    %2567 = vmatpush1.msra.mxu0 %v1899
    %2568 = vmatprep.subr.mxu0 0.0
    %2569 = vmatpush1.msra.mxu0 %v1900
    %2570 = vmatprep.subr.mxu0 0.0
    %2571 = vmatpush1.msra.mxu0 %v1901
    %2572 = vmatprep.subr.mxu0 0.0
    %2573 = vmatpush1.msra.mxu0 %v1902
    %2574 = vmatprep.subr.mxu0 0.0
    %2575 = vmatpush1.msra.mxu0 %v1903
    %2576 = vmatprep.subr.mxu0 0.0
    %2577 = vmatpush1.msra.mxu0 %v1904
    %2578 = vmatprep.subr.mxu0 0.0
    %2579 = vmatpush1.msra.mxu0 %v1905
    %2580 = vmatprep.subr.mxu0 0.0
    %2581 = vmatpush1.msra.mxu0 %v1906
    %2582 = vmatprep.subr.mxu0 0.0
    %2583 = vmatpush1.msra.mxu0 %v1907
    %2584 = vmatprep.subr.mxu0 0.0
    %2585 = vmatpush1.msra.mxu0 %v1908
    %2586 = vmatprep.subr.mxu0 0.0
    %2587 = vmatpush1.msra.mxu0 %v1909
    %2588 = vmatprep.subr.mxu0 0.0
    %2589 = vmatpush1.msra.mxu0 %v1910
    %2590 = vmatprep.subr.mxu0 0.0
    %2591 = vmatpush1.msra.mxu0 %v1911
    %2592 = vmatprep.subr.mxu0 0.0
    %2593 = vmatpush1.msra.mxu0 %v1912
    %2594 = vmatprep.subr.mxu0 0.0
    %2595 = vmatpush1.msra.mxu0 %v1913
    %2596 = vmatprep.subr.mxu0 0.0
    %2597 = vmatpush1.msra.mxu0 %v1914
    %2598 = vmatprep.subr.mxu0 0.0
    %2599 = vmatpush1.msra.mxu0 %v1915
    %2600 = vmatprep.subr.mxu0 0.0
    %2601 = vmatpush1.msra.mxu0 %v1916
    %2602 = vmatprep.subr.mxu0 0.0
    %2603 = vmatpush1.msra.mxu0 %v1917
    %2604 = vmatprep.subr.mxu0 0.0
    %2605 = vmatpush1.msra.mxu0 %v1918
    %2606 = vmatprep.mubr.f32.mxu0 %v2391
    %2607 = vmatmul.mubr.f32.gmra.mrb[0].mxu0 %v2383
    %v2608 = vpop.f32.mrb[0].mxu0
    %v2609 = vadd.f32 %v2539, %v2608
    %v2610 = vpop.f32.mrb[0].mxu0
    %2611 = vdwg.mxu0
    %2612 = vmatprep.subr.mxu0 0.0
    %2613 = vmatpush1.msra.mxu0 %v1919
    %2614 = vmatprep.subr.mxu0 0.0
    %2615 = vmatpush1.msra.mxu0 %v1920
    %2616 = vmatprep.subr.mxu0 0.0
    %2617 = vmatpush1.msra.mxu0 %v1921
    %2618 = vmatprep.subr.mxu0 0.0
    %2619 = vmatpush1.msra.mxu0 %v1922
    %2620 = vmatprep.subr.mxu0 0.0
    %2621 = vmatpush1.msra.mxu0 %v1923
    %2622 = vmatprep.subr.mxu0 0.0
    %2623 = vmatpush1.msra.mxu0 %v1924
    %2624 = vmatprep.subr.mxu0 0.0
    %2625 = vmatpush1.msra.mxu0 %v1925
    %2626 = vmatprep.subr.mxu0 0.0
    %2627 = vmatpush1.msra.mxu0 %v1926
    %2628 = vmatprep.subr.mxu0 0.0
    %2629 = vmatpush1.msra.mxu0 %v1927
    %2630 = vmatprep.subr.mxu0 0.0
    %2631 = vmatpush1.msra.mxu0 %v1928
    %2632 = vmatprep.subr.mxu0 0.0
    %2633 = vmatpush1.msra.mxu0 %v1929
    %2634 = vmatprep.subr.mxu0 0.0
    %2635 = vmatpush1.msra.mxu0 %v1930
    %2636 = vmatprep.subr.mxu0 0.0
    %2637 = vmatpush1.msra.mxu0 %v1931
    %2638 = vmatprep.subr.mxu0 0.0
    %2639 = vmatpush1.msra.mxu0 %v1932
    %2640 = vmatprep.subr.mxu0 0.0
    %2641 = vmatpush1.msra.mxu0 %v1933
    %2642 = vmatprep.subr.mxu0 0.0
    %2643 = vmatpush1.msra.mxu0 %v1934
    %2644 = vmatprep.subr.mxu0 0.0
    %2645 = vmatpush1.msra.mxu0 %v1935
    %2646 = vmatprep.subr.mxu0 0.0
    %2647 = vmatpush1.msra.mxu0 %v1936
    %2648 = vmatprep.subr.mxu0 0.0
    %2649 = vmatpush1.msra.mxu0 %v1937
    %2650 = vmatprep.subr.mxu0 0.0
    %2651 = vmatpush1.msra.mxu0 %v1938
    %2652 = vmatprep.subr.mxu0 0.0
    %2653 = vmatpush1.msra.mxu0 %v1939
    %2654 = vmatprep.subr.mxu0 0.0
    %2655 = vmatpush1.msra.mxu0 %v1940
    %2656 = vmatprep.subr.mxu0 0.0
    %2657 = vmatpush1.msra.mxu0 %v1941
    %2658 = vmatprep.subr.mxu0 0.0
    %2659 = vmatpush1.msra.mxu0 %v1942
    %2660 = vmatprep.subr.mxu0 0.0
    %2661 = vmatpush1.msra.mxu0 %v1943
    %2662 = vmatprep.subr.mxu0 0.0
    %2663 = vmatpush1.msra.mxu0 %v1944
    %2664 = vmatprep.subr.mxu0 0.0
    %2665 = vmatpush1.msra.mxu0 %v1945
    %2666 = vmatprep.subr.mxu0 0.0
    %2667 = vmatpush1.msra.mxu0 %v1946
    %2668 = vmatprep.subr.mxu0 0.0
    %2669 = vmatpush1.msra.mxu0 %v1947
    %2670 = vmatprep.subr.mxu0 0.0
    %2671 = vmatpush1.msra.mxu0 0.0
    %2672 = vmatprep.subr.mxu0 0.0
    %2673 = vmatpush1.msra.mxu0 0.0
    %2674 = vmatprep.subr.mxu0 0.0
    %2675 = vmatpush1.msra.mxu0 0.0
    %2676 = vmatprep.mubr.f32.mxu0 %v2400
    %2677 = vmatmul.mubr.f32.gmra.mrb[0].mxu0 %v2390
    %v2678 = vpop.f32.mrb[0].mxu0
    %v2679 = vadd.f32 %v2609, %v2678
    %v2680 = vpop.f32.mrb[0].mxu0
    %2681 = vdwg.mxu0
    %v2682 = vld [vmem:[%s9] sm:$0x1]
    %v2684 = vlaneseq
    %v2685 = vshrl.u32 %v2684, 7
    %v2686 = vsub.s32 0, %v2685
    %v2687 = vrot.slane %v2682, %v2686
    %v2689 = vadd.f32 %v2679, %v2687
    %vm2690 = vcmask 58368
    %2691 = vst.msk [vmem:[#allocation5] sm:$0x3] %vm2690, %v2689
    // Predicated region
    $region42: #{tpu_custom_call.1} parent=1 // pred_check
      _
    $region43: #{tpu_custom_call.1} parent=1 // pred_check_branch
      %2693 = sbr.rel (0) target = $region45
    $region44: #{tpu_custom_call.1} parent=1 // pred_region
      %s2695 = ssub.s32 32, 32
      %2696 = vsyncadd [#allocation6], %s2695
      %s2698 = sshll.u32 [#allocation5], 4
      %s2699 = int_to_ptr.vmem [resolvable:$true] %s2698
      %2701 = dma.vmem_to_hbm [thread:$0]  %s2699, 32, %s10, [#allocation6]
    $region45: #{tpu_custom_call.1} parent=1 // pred_fallthru
      _
    // Predicated region
    $region46: #{tpu_custom_call.1} parent=1 // pred_check
      _
    $region47: #{tpu_custom_call.1} parent=1 // pred_check_branch
      %2703 = sbr.rel (0) target = $region49
    $region48: #{tpu_custom_call.1} parent=1 // pred_region
      %2704 = dma.done [#allocation6], 32
    $region49: #{tpu_custom_call.1} parent=1 // pred_fallthru
      _
    %2705 = vsyncpa [#allocation6], 1

</llo_original>
